<compile_context>
chip_gen: v7x
topology: tpu7x:2x2x1
jax: 0.10.0
libtpu: 0.0.40
codegen_flags: <defaults>
</compile_context>

<pallas_src>
import numpy as np

import jax
import jax.numpy as jnp
from jax.experimental import pallas as pl
from jax.experimental.pallas import tpu as pltpu


# ---------------------------------------------------------------------------
# Parameter construction (deterministic; mimics nn.Linear init + the
# 'replacement' mask from MaskLinearAE.get_mask, then zeros masked weights).
# ---------------------------------------------------------------------------
def make_replacement_mask(rng: np.random.RandomState, out_dim: int, in_dim: int):
    n = out_dim * in_dim
    mask = np.ones((n,), dtype=np.float32)
    zero_idx = rng.choice(n, size=n, replace=True)
    zero_idx = np.unique(zero_idx)
    mask[zero_idx] = 0.0
    return mask.reshape(out_dim, in_dim)


def init_masked_ae_params(input_dim_list, seed=0):
    """Returns list of (W, b): W (out, in) with masked entries zeroed,
    b (out, 1).  All float32."""
    output_dim_list = input_dim_list[::-1][1:]
    dim_list = list(input_dim_list) + list(output_dim_list)
    n_layer = len(dim_list)

    rng = np.random.RandomState(seed)
    params = []
    for i in range(n_layer - 1):
        in_dim, out_dim = dim_list[i], dim_list[i + 1]
        bound = 1.0 / np.sqrt(in_dim)
        # nn.Linear default init: U(-1/sqrt(in), 1/sqrt(in)) for weight & bias
        w = rng.uniform(-bound, bound, size=(out_dim, in_dim)).astype(np.float32)
        b = rng.uniform(-bound, bound, size=(out_dim,)).astype(np.float32)
        mask = make_replacement_mask(rng, out_dim, in_dim)
        w = w * mask  # layer.weight.data[mask == 0] = 0
        params.append((jnp.asarray(w), jnp.asarray(b.reshape(out_dim, 1))))
    return params, dim_list


# ---------------------------------------------------------------------------
# Pallas kernel: fused n-layer masked autoencoder forward (batch on lanes).
# ---------------------------------------------------------------------------
def _sigmoid_tanh(z):
    # sigmoid(z) = 0.5 * tanh(0.5 * z) + 0.5 : 1 EUP op + 1 VPU fma.
    return 0.5 * jnp.tanh(0.5 * z) + 0.5


def make_masked_ae_kernel(n_layers, matmul_dtype):
    def kernel(*refs):
        x_ref = refs[0]           # (B_tile, D_in)  natural layout
        out_ref = refs[-1]        # (B_tile, D_out) natural layout
        p_refs = refs[1:-1]       # w0, b0, w1, b1, ...  (w pre-cast to matmul_dtype)

        # Transpose the input tile on the XLU -> batch on lanes for all matmuls.
        h = x_ref[...].T          # (D_in, B_tile), f32
        for li in range(n_layers):
            w_ref = p_refs[2 * li]        # (out, in), matmul_dtype
            b_ref = p_refs[2 * li + 1]    # (out, 1),  f32
            # y^T = W(out,in) @ h^T(in,B) + b(out,1) : batch stays on lanes.
            y = jnp.dot(w_ref[...], h.astype(matmul_dtype),
                        preferred_element_type=jnp.float32) + b_ref[...]
            if li == 0 or li == n_layers - 1:
                h = _sigmoid_tanh(y)          # sigmoid (dropout = identity)
            else:
                h = jnp.maximum(y, 0.0)       # relu    (dropout = identity)
        # Transpose back and store in the caller's (batch, feature) layout:
        # one HBM pass for the output, no wrapper-side transpose.
        out_ref[...] = h.T.astype(out_ref.dtype)

    return kernel


def _round_up(v, m):
    return ((v + m - 1) // m) * m


def _choose_batch_tile(B):
    """Large lane-dense tiles; keep >=2 grid steps when the batch allows it
    (v7x megacore), cap at 2048 (safe under v5e's 16 MiB scoped VMEM)."""
    if B >= 4096:
        return 2048
    if B >= 1024:
        return _round_up(B // 2, 512)     # two "parallel" steps
    return _round_up(max(B, 8), 8)        # single tile for small batches


def masked_ae_forward(x, params, *, batch_tile=None, matmul_dtype=jnp.bfloat16,
                      vmem_limit_bytes=None):
    """x: (B, D_in) float32.  params: list of (W(out,in), b(out,1)).
    Returns (B, D_out) float32."""
    B, D_in = x.shape
    D_out = params[-1][0].shape[0]
    n_layers = len(params)

    if batch_tile is None:
        batch_tile = _choose_batch_tile(B)

    # Pad the batch only if the tile does not divide it (fallback path; the
    # tile heuristic above normally avoids this whole-array copy).
    B_pad = _round_up(B, batch_tile)
    x_in = x if B_pad == B else jnp.pad(x, ((0, B_pad - B), (0, 0)))

    # x tiled over batch in its natural layout; weights pre-cast to the MXU
    # dtype once here (no per-step converts); biases stay f32 (full blocks).
    in_specs = [pl.BlockSpec((batch_tile, D_in), lambda i: (i, 0))]
    flat_params = []
    for (w, b) in params:
        w_c = w.astype(matmul_dtype)
        in_specs.append(pl.BlockSpec(w_c.shape, lambda i: (0, 0)))
        in_specs.append(pl.BlockSpec(b.shape, lambda i: (0, 0)))
        flat_params.extend([w_c, b])

    out_spec = pl.BlockSpec((batch_tile, D_out), lambda i: (i, 0))

    # Advisory cost estimate so XLA schedules this small call sensibly.
    flops = 2 * B_pad * sum(int(w.shape[0]) * int(w.shape[1]) for (w, _) in params)
    transcendentals = B_pad * (int(params[0][0].shape[0]) + D_out)   # tanh per sigmoid
    bytes_accessed = 4 * (x.size + B_pad * D_out) + sum(
        w.dtype.itemsize * w.size + b.dtype.itemsize * b.size
        for (w, b) in ((p[0].astype(matmul_dtype), p[1]) for p in params))
    cost = pl.CostEstimate(flops=flops,
                           transcendentals=transcendentals,
                           bytes_accessed=bytes_accessed)

    out = pl.pallas_call(
        make_masked_ae_kernel(n_layers, matmul_dtype),
        out_shape=jax.ShapeDtypeStruct((B_pad, D_out), jnp.float32),
        grid_spec=pltpu.PrefetchScalarGridSpec(
            num_scalar_prefetch=0,
            grid=(B_pad // batch_tile,),
            in_specs=in_specs,
            out_specs=out_spec,
        ),
        compiler_params=pltpu.CompilerParams(
            dimension_semantics=("parallel",),
            vmem_limit_bytes=vmem_limit_bytes),
        cost_estimate=cost,
    )(x_in, *flat_params)

    return out if B_pad == B else out[:B]


# ---------------------------------------------------------------------------
# Pure-JAX f32 reference (matches the PyTorch forward, eval-mode dropout).
# ---------------------------------------------------------------------------
def masked_ae_reference(x, params):
    w0, b0 = params[0]
    h = jax.nn.sigmoid(x @ w0.T + b0.T)
    for (w, b) in params[1:-1]:
        h = jnp.maximum(h @ w.T + b.T, 0.0)
    w_last, b_last = params[-1]
    return jax.nn.sigmoid(h @ w_last.T + b_last.T)


if __name__ == "__main__":
    # input_dim_list = [32, 16, 8] -> dim_list = [32, 16, 8, 16, 32]
    # 4 linear layers: 32->16 (sigmoid), 16->8 (relu), 8->16 (relu), 16->32 (sigmoid)
    input_dim_list = [32, 16, 8]
    params, dim_list = init_masked_ae_params(input_dim_list, seed=0)

    B = 1024  # auto tile -> 512-wide lane-dense tiles, 2 "parallel" grid steps
    key = jax.random.PRNGKey(0)
    x = jax.random.uniform(key, (B, dim_list[0]), dtype=jnp.float32)

    out = masked_ae_forward(x, params, matmul_dtype=jnp.bfloat16)
    out = jax.block_until_ready(out)

    ref = masked_ae_reference(x, params)
    # bf16 MXU operands vs. f32 reference -> loose tolerance.
    np.testing.assert_allclose(np.asarray(out), np.asarray(ref),
                               rtol=2e-2, atol=2e-2)
    assert out.shape == (B, dim_list[-1])

    print("KERNEL_OK")
</pallas_src>

<mosaic_0001>
module attributes {stable_mosaic.version = 11 : i64} {
  func.func @kernel(%arg0: i32, %arg1: memref<512x32xf32, #tpu.memory_space<vmem>>, %arg2: memref<16x32xbf16, #tpu.memory_space<vmem>>, %arg3: memref<16x1xf32, #tpu.memory_space<vmem>>, %arg4: memref<8x16xbf16, #tpu.memory_space<vmem>>, %arg5: memref<8x1xf32, #tpu.memory_space<vmem>>, %arg6: memref<16x8xbf16, #tpu.memory_space<vmem>>, %arg7: memref<16x1xf32, #tpu.memory_space<vmem>>, %arg8: memref<32x16xbf16, #tpu.memory_space<vmem>>, %arg9: memref<32x1xf32, #tpu.memory_space<vmem>>, %arg10: memref<512x32xf32, #tpu.memory_space<vmem>>) attributes {dimension_semantics = [#tpu.dimension_semantics<parallel>], iteration_bounds = array<i64: 2>, scalar_prefetch = 0 : i64, scratch_operands = 0 : i64, tpu.core_type = #tpu.core_type<tc>, window_params = [{transform_indices = @transform_0, window_bounds = array<i64: 512, 32>}, {pipeline_mode = #tpu.pipeline_mode<synchronous>, transform_indices = @transform_1, window_bounds = array<i64: 16, 32>}, {pipeline_mode = #tpu.pipeline_mode<synchronous>, transform_indices = @transform_2, window_bounds = array<i64: 16, 1>}, {pipeline_mode = #tpu.pipeline_mode<synchronous>, transform_indices = @transform_3, window_bounds = array<i64: 8, 16>}, {pipeline_mode = #tpu.pipeline_mode<synchronous>, transform_indices = @transform_4, window_bounds = array<i64: 8, 1>}, {pipeline_mode = #tpu.pipeline_mode<synchronous>, transform_indices = @transform_5, window_bounds = array<i64: 16, 8>}, {pipeline_mode = #tpu.pipeline_mode<synchronous>, transform_indices = @transform_6, window_bounds = array<i64: 16, 1>}, {pipeline_mode = #tpu.pipeline_mode<synchronous>, transform_indices = @transform_7, window_bounds = array<i64: 32, 16>}, {pipeline_mode = #tpu.pipeline_mode<synchronous>, transform_indices = @transform_8, window_bounds = array<i64: 32, 1>}, {transform_indices = @transform_9, window_bounds = array<i64: 512, 32>}]} {
    %c0 = arith.constant 0 : index
    %c0_0 = arith.constant 0 : index
    %0 = vector.load %arg1[%c0, %c0_0] : memref<512x32xf32, #tpu.memory_space<vmem>>, vector<512x32xf32>
    %1 = tpu.transpose %0, [1, 0] : vector<512x32xf32> -> vector<32x512xf32>
    %c0_1 = arith.constant 0 : index
    %c0_2 = arith.constant 0 : index
    %2 = vector.load %arg2[%c0_1, %c0_2] : memref<16x32xbf16, #tpu.memory_space<vmem>>, vector<16x32xbf16>
    %3 = arith.truncf %1 : vector<32x512xf32> to vector<32x512xbf16>
    %cst = arith.constant dense<0.000000e+00> : vector<16x512xf32>
    %4 = tpu.matmul %2, %3, %cst {dimension_numbers = #tpu.dot_dimension_numbers<[1], [0], [0], [1], [0, 0, 1, 1], [], []>} : vector<16x32xbf16>, vector<32x512xbf16>, vector<16x512xf32> -> vector<16x512xf32>
    %c0_3 = arith.constant 0 : index
    %c0_4 = arith.constant 0 : index
    %5 = vector.load %arg3[%c0_3, %c0_4] : memref<16x1xf32, #tpu.memory_space<vmem>>, vector<16x1xf32>
    %6 = vector.broadcast %5 : vector<16x1xf32> to vector<16x512xf32>
    %7 = arith.addf %4, %6 : vector<16x512xf32>
    %cst_5 = arith.constant 5.000000e-01 : f32
    %8 = vector.broadcast %cst_5 : f32 to vector<16x512xf32>
    %9 = arith.mulf %8, %7 : vector<16x512xf32>
    %10 = math.tanh %9 : vector<16x512xf32>
    %cst_6 = arith.constant 5.000000e-01 : f32
    %11 = vector.broadcast %cst_6 : f32 to vector<16x512xf32>
    %12 = arith.mulf %11, %10 : vector<16x512xf32>
    %cst_7 = arith.constant 5.000000e-01 : f32
    %13 = vector.broadcast %cst_7 : f32 to vector<16x512xf32>
    %14 = arith.addf %12, %13 : vector<16x512xf32>
    %c0_8 = arith.constant 0 : index
    %c0_9 = arith.constant 0 : index
    %15 = vector.load %arg4[%c0_8, %c0_9] : memref<8x16xbf16, #tpu.memory_space<vmem>>, vector<8x16xbf16>
    %16 = arith.truncf %14 : vector<16x512xf32> to vector<16x512xbf16>
    %cst_10 = arith.constant dense<0.000000e+00> : vector<8x512xf32>
    %17 = tpu.matmul %15, %16, %cst_10 {dimension_numbers = #tpu.dot_dimension_numbers<[1], [0], [0], [1], [0, 0, 1, 1], [], []>} : vector<8x16xbf16>, vector<16x512xbf16>, vector<8x512xf32> -> vector<8x512xf32>
    %c0_11 = arith.constant 0 : index
    %c0_12 = arith.constant 0 : index
    %18 = vector.load %arg5[%c0_11, %c0_12] : memref<8x1xf32, #tpu.memory_space<vmem>>, vector<8x1xf32>
    %19 = vector.broadcast %18 : vector<8x1xf32> to vector<8x512xf32>
    %20 = arith.addf %17, %19 : vector<8x512xf32>
    %cst_13 = arith.constant 0.000000e+00 : f32
    %21 = vector.broadcast %cst_13 : f32 to vector<8x512xf32>
    %22 = arith.maximumf %20, %21 : vector<8x512xf32>
    %c0_14 = arith.constant 0 : index
    %c0_15 = arith.constant 0 : index
    %23 = vector.load %arg6[%c0_14, %c0_15] : memref<16x8xbf16, #tpu.memory_space<vmem>>, vector<16x8xbf16>
    %24 = arith.truncf %22 : vector<8x512xf32> to vector<8x512xbf16>
    %cst_16 = arith.constant dense<0.000000e+00> : vector<16x512xf32>
    %25 = tpu.matmul %23, %24, %cst_16 {dimension_numbers = #tpu.dot_dimension_numbers<[1], [0], [0], [1], [0, 0, 1, 1], [], []>} : vector<16x8xbf16>, vector<8x512xbf16>, vector<16x512xf32> -> vector<16x512xf32>
    %c0_17 = arith.constant 0 : index
    %c0_18 = arith.constant 0 : index
    %26 = vector.load %arg7[%c0_17, %c0_18] : memref<16x1xf32, #tpu.memory_space<vmem>>, vector<16x1xf32>
    %27 = vector.broadcast %26 : vector<16x1xf32> to vector<16x512xf32>
    %28 = arith.addf %25, %27 : vector<16x512xf32>
    %cst_19 = arith.constant 0.000000e+00 : f32
    %29 = vector.broadcast %cst_19 : f32 to vector<16x512xf32>
    %30 = arith.maximumf %28, %29 : vector<16x512xf32>
    %c0_20 = arith.constant 0 : index
    %c0_21 = arith.constant 0 : index
    %31 = vector.load %arg8[%c0_20, %c0_21] : memref<32x16xbf16, #tpu.memory_space<vmem>>, vector<32x16xbf16>
    %32 = arith.truncf %30 : vector<16x512xf32> to vector<16x512xbf16>
    %cst_22 = arith.constant dense<0.000000e+00> : vector<32x512xf32>
    %33 = tpu.matmul %31, %32, %cst_22 {dimension_numbers = #tpu.dot_dimension_numbers<[1], [0], [0], [1], [0, 0, 1, 1], [], []>} : vector<32x16xbf16>, vector<16x512xbf16>, vector<32x512xf32> -> vector<32x512xf32>
    %c0_23 = arith.constant 0 : index
    %c0_24 = arith.constant 0 : index
    %34 = vector.load %arg9[%c0_23, %c0_24] : memref<32x1xf32, #tpu.memory_space<vmem>>, vector<32x1xf32>
    %35 = vector.broadcast %34 : vector<32x1xf32> to vector<32x512xf32>
    %36 = arith.addf %33, %35 : vector<32x512xf32>
    %cst_25 = arith.constant 5.000000e-01 : f32
    %37 = vector.broadcast %cst_25 : f32 to vector<32x512xf32>
    %38 = arith.mulf %37, %36 : vector<32x512xf32>
    %39 = math.tanh %38 : vector<32x512xf32>
    %cst_26 = arith.constant 5.000000e-01 : f32
    %40 = vector.broadcast %cst_26 : f32 to vector<32x512xf32>
    %41 = arith.mulf %40, %39 : vector<32x512xf32>
    %cst_27 = arith.constant 5.000000e-01 : f32
    %42 = vector.broadcast %cst_27 : f32 to vector<32x512xf32>
    %43 = arith.addf %41, %42 : vector<32x512xf32>
    %44 = tpu.transpose %43, [1, 0] : vector<32x512xf32> -> vector<512x32xf32>
    %c0_28 = arith.constant 0 : index
    %c0_29 = arith.constant 0 : index
    %45 = vector.load %arg10[%c0_28, %c0_29] : memref<512x32xf32, #tpu.memory_space<vmem>>, vector<512x32xf32>
    tpu.vector_store %arg10[%c0_28, %c0_29], %44 {strides = array<i32>} : memref<512x32xf32, #tpu.memory_space<vmem>>, vector<512x32xf32>,
    return
  }
  func.func @transform_0(%arg0: i32) -> (i32, i32) {
    %c0_i32 = arith.constant 0 : i32
    %c0_i32_0 = arith.constant 0 : i32
    return %arg0, %c0_i32 : i32, i32
  }
  func.func @transform_1(%arg0: i32) -> (i32, i32) {
    %c0_i32 = arith.constant 0 : i32
    %c0_i32_0 = arith.constant 0 : i32
    %c0_i32_1 = arith.constant 0 : i32
    return %c0_i32, %c0_i32_0 : i32, i32
  }
  func.func @transform_2(%arg0: i32) -> (i32, i32) {
    %c0_i32 = arith.constant 0 : i32
    %c0_i32_0 = arith.constant 0 : i32
    %c0_i32_1 = arith.constant 0 : i32
    return %c0_i32, %c0_i32_0 : i32, i32
  }
  func.func @transform_3(%arg0: i32) -> (i32, i32) {
    %c0_i32 = arith.constant 0 : i32
    %c0_i32_0 = arith.constant 0 : i32
    %c0_i32_1 = arith.constant 0 : i32
    return %c0_i32, %c0_i32_0 : i32, i32
  }
  func.func @transform_4(%arg0: i32) -> (i32, i32) {
    %c0_i32 = arith.constant 0 : i32
    %c0_i32_0 = arith.constant 0 : i32
    %c0_i32_1 = arith.constant 0 : i32
    return %c0_i32, %c0_i32_0 : i32, i32
  }
  func.func @transform_5(%arg0: i32) -> (i32, i32) {
    %c0_i32 = arith.constant 0 : i32
    %c0_i32_0 = arith.constant 0 : i32
    %c0_i32_1 = arith.constant 0 : i32
    return %c0_i32, %c0_i32_0 : i32, i32
  }
  func.func @transform_6(%arg0: i32) -> (i32, i32) {
    %c0_i32 = arith.constant 0 : i32
    %c0_i32_0 = arith.constant 0 : i32
    %c0_i32_1 = arith.constant 0 : i32
    return %c0_i32, %c0_i32_0 : i32, i32
  }
  func.func @transform_7(%arg0: i32) -> (i32, i32) {
    %c0_i32 = arith.constant 0 : i32
    %c0_i32_0 = arith.constant 0 : i32
    %c0_i32_1 = arith.constant 0 : i32
    return %c0_i32, %c0_i32_0 : i32, i32
  }
  func.func @transform_8(%arg0: i32) -> (i32, i32) {
    %c0_i32 = arith.constant 0 : i32
    %c0_i32_0 = arith.constant 0 : i32
    %c0_i32_1 = arith.constant 0 : i32
    return %c0_i32, %c0_i32_0 : i32, i32
  }
  func.func @transform_9(%arg0: i32) -> (i32, i32) {
    %c0_i32 = arith.constant 0 : i32
    %c0_i32_0 = arith.constant 0 : i32
    return %arg0, %c0_i32 : i32, i32
  }
}

</mosaic_0001>

<llo_original>
// kernel: tpu_custom_call.1
$region0: #{tpu_custom_call.1}
  #allocation0 [shape = 'u32[]', space=smem, size = 0x4, offset = 0x4, fixed_abs, tag = 'smem constant byte address 0x4 - core index']
  #allocation1 [shape = 'u32[144,128]{1,0:T(1,128)}', space=vmem, size = 0x12000, scoped, tag = 'internal scratch']
  %s0 = inlined_call_operand.vmem [shape: f32[1024,32], index: 0, kind: input, shape index: {}]
  %s1 = inlined_call_operand.vmem [shape: bf16[16,32], index: 1, kind: input, shape index: {}]
  %s2 = inlined_call_operand.vmem [shape: f32[16,1], index: 2, kind: input, shape index: {}]
  %s3 = inlined_call_operand.vmem [shape: bf16[8,16], index: 3, kind: input, shape index: {}]
  %s4 = inlined_call_operand.vmem [shape: f32[8,1], index: 4, kind: input, shape index: {}]
  %s5 = inlined_call_operand.vmem [shape: bf16[16,8], index: 5, kind: input, shape index: {}]
  %s6 = inlined_call_operand.vmem [shape: f32[16,1], index: 6, kind: input, shape index: {}]
  %s7 = inlined_call_operand.vmem [shape: bf16[32,16], index: 7, kind: input, shape index: {}]
  %s8 = inlined_call_operand.vmem [shape: f32[32,1], index: 8, kind: input, shape index: {}]
  %s9 = inlined_call_operand.vmem [shape: f32[1024,32], index: 9, kind: output, shape index: {}]
  %s10 = sld [smem:[#allocation0]]
  $region69: #{tpu_custom_call.1} parent=0
    _
  %s12 = ssub.s32 1, %s10
  %s13 = scalar_select 0, %s12, %s10
  loop: start=0, step=1, limit=4
  $region2: #{tpu_custom_call.1} parent=0 // loop_pre_header
    _
  $region3: #{tpu_custom_call.1} parent=0 // loop_header
    %s15 = sphi 0, %s19
    %p16 = scmp.ge.s32.totalorder %s15, 4
    %s25 = sphi 0, %s27
    %s28 = sphi 0, %s25
    %s29 = sphi 0, %s28
    %s45 = sphi 0, %s29
    %s49 = sphi 0, %s49
    %s51 = sphi 0, %s49
    %s52 = sphi 0, %s51
    %s66 = sphi 0, %s52
    %s70 = sphi 0, %s70
    %s72 = sphi 0, %s70
    %s73 = sphi 0, %s72
    %s87 = sphi 0, %s73
    %s91 = sphi 0, %s91
    %s93 = sphi 0, %s91
    %s94 = sphi 0, %s93
    %s108 = sphi 0, %s94
    %s112 = sphi 0, %s112
    %s114 = sphi 0, %s112
    %s115 = sphi 0, %s114
    %s129 = sphi 0, %s115
    %s133 = sphi 0, %s133
    %s135 = sphi 0, %s133
    %s136 = sphi 0, %s135
    %s150 = sphi 0, %s136
    %s154 = sphi 0, %s154
    %s156 = sphi 0, %s154
    %s157 = sphi 0, %s156
    %s171 = sphi 0, %s157
    %s175 = sphi 0, %s175
    %s177 = sphi 0, %s175
    %s178 = sphi 0, %s177
    %s192 = sphi 0, %s178
    %s196 = sphi 0, %s196
    %s198 = sphi 0, %s196
    %s199 = sphi 0, %s198
    %s213 = sphi 0, %s199
    %s219 = sphi 0, %s221
    %s222 = sphi 0, %s219
    %s223 = sphi 0, %s222
    %s239 = sphi 0, %s223
  $region4: #{tpu_custom_call.1} parent=0 // loop_header_branch
    %18 = sbr.rel (%p16) target = $region8
  $region5: #{tpu_custom_call.1} parent=0 // loop_body
    %s20 = ssub.s32 %s15, 1
    %s21 = ssub.s32 %s15, 2
    %s22 = sadd.s32 %s15, 1
    %s23 = ssub.s32 %s15, %s22
    %p24 = scmp.eq.s32.totalorder %s23, 0
    %s26 = sadd.s32 %s25, 1
    %s27 = scalar_select %p24, %s25, %s26
    %p30 = pneg %p24
    %p31 = scmp.eq.s32.totalorder %s15, 1
    %p32 = por %p30, %p31
    %p33 = scmp.ne.s32.totalorder %s25, %s28
    %p34 = scmp.eq.s32.totalorder %s15, 0
    %p35 = por %p33, %p34
    %p36 = scmp.ne.s32.totalorder %s25, %s28
    %p37 = scmp.eq.s32.totalorder %s20, 1
    %p38 = por %p36, %p37
    %p39 = scmp.ne.s32.totalorder %s28, %s29
    %p40 = scmp.eq.s32.totalorder %s20, 0
    %p41 = por %p39, %p40
    %p42 = scmp.ne.s32.totalorder %s28, %s29
    %p43 = scmp.eq.s32.totalorder %s21, 1
    %p44 = por %p42, %p43
    %p46 = scmp.ne.s32.totalorder %s29, %s45
    %p47 = scmp.eq.s32.totalorder %s21, 0
    %p48 = por %p46, %p47
    %s50 = sadd.s32 %s49, 1
    %p53 = scmp.eq.s32.totalorder %s15, 1
    %p54 = scmp.ne.s32.totalorder %s49, %s51
    %p55 = scmp.eq.s32.totalorder %s15, 0
    %p56 = por %p54, %p55
    %p57 = scmp.ne.s32.totalorder %s49, %s51
    %p58 = scmp.eq.s32.totalorder %s20, 1
    %p59 = por %p57, %p58
    %p60 = scmp.ne.s32.totalorder %s51, %s52
    %p61 = scmp.eq.s32.totalorder %s20, 0
    %p62 = por %p60, %p61
    %p63 = scmp.ne.s32.totalorder %s51, %s52
    %p64 = scmp.eq.s32.totalorder %s21, 1
    %p65 = por %p63, %p64
    %p67 = scmp.ne.s32.totalorder %s52, %s66
    %p68 = scmp.eq.s32.totalorder %s21, 0
    %p69 = por %p67, %p68
    %s71 = sadd.s32 %s70, 1
    %p74 = scmp.eq.s32.totalorder %s15, 1
    %p75 = scmp.ne.s32.totalorder %s70, %s72
    %p76 = scmp.eq.s32.totalorder %s15, 0
    %p77 = por %p75, %p76
    %p78 = scmp.ne.s32.totalorder %s70, %s72
    %p79 = scmp.eq.s32.totalorder %s20, 1
    %p80 = por %p78, %p79
    %p81 = scmp.ne.s32.totalorder %s72, %s73
    %p82 = scmp.eq.s32.totalorder %s20, 0
    %p83 = por %p81, %p82
    %p84 = scmp.ne.s32.totalorder %s72, %s73
    %p85 = scmp.eq.s32.totalorder %s21, 1
    %p86 = por %p84, %p85
    %p88 = scmp.ne.s32.totalorder %s73, %s87
    %p89 = scmp.eq.s32.totalorder %s21, 0
    %p90 = por %p88, %p89
    %s92 = sadd.s32 %s91, 1
    %p95 = scmp.eq.s32.totalorder %s15, 1
    %p96 = scmp.ne.s32.totalorder %s91, %s93
    %p97 = scmp.eq.s32.totalorder %s15, 0
    %p98 = por %p96, %p97
    %p99 = scmp.ne.s32.totalorder %s91, %s93
    %p100 = scmp.eq.s32.totalorder %s20, 1
    %p101 = por %p99, %p100
    %p102 = scmp.ne.s32.totalorder %s93, %s94
    %p103 = scmp.eq.s32.totalorder %s20, 0
    %p104 = por %p102, %p103
    %p105 = scmp.ne.s32.totalorder %s93, %s94
    %p106 = scmp.eq.s32.totalorder %s21, 1
    %p107 = por %p105, %p106
    %p109 = scmp.ne.s32.totalorder %s94, %s108
    %p110 = scmp.eq.s32.totalorder %s21, 0
    %p111 = por %p109, %p110
    %s113 = sadd.s32 %s112, 1
    %p116 = scmp.eq.s32.totalorder %s15, 1
    %p117 = scmp.ne.s32.totalorder %s112, %s114
    %p118 = scmp.eq.s32.totalorder %s15, 0
    %p119 = por %p117, %p118
    %p120 = scmp.ne.s32.totalorder %s112, %s114
    %p121 = scmp.eq.s32.totalorder %s20, 1
    %p122 = por %p120, %p121
    %p123 = scmp.ne.s32.totalorder %s114, %s115
    %p124 = scmp.eq.s32.totalorder %s20, 0
    %p125 = por %p123, %p124
    %p126 = scmp.ne.s32.totalorder %s114, %s115
    %p127 = scmp.eq.s32.totalorder %s21, 1
    %p128 = por %p126, %p127
    %p130 = scmp.ne.s32.totalorder %s115, %s129
    %p131 = scmp.eq.s32.totalorder %s21, 0
    %p132 = por %p130, %p131
    %s134 = sadd.s32 %s133, 1
    %p137 = scmp.eq.s32.totalorder %s15, 1
    %p138 = scmp.ne.s32.totalorder %s133, %s135
    %p139 = scmp.eq.s32.totalorder %s15, 0
    %p140 = por %p138, %p139
    %p141 = scmp.ne.s32.totalorder %s133, %s135
    %p142 = scmp.eq.s32.totalorder %s20, 1
    %p143 = por %p141, %p142
    %p144 = scmp.ne.s32.totalorder %s135, %s136
    %p145 = scmp.eq.s32.totalorder %s20, 0
    %p146 = por %p144, %p145
    %p147 = scmp.ne.s32.totalorder %s135, %s136
    %p148 = scmp.eq.s32.totalorder %s21, 1
    %p149 = por %p147, %p148
    %p151 = scmp.ne.s32.totalorder %s136, %s150
    %p152 = scmp.eq.s32.totalorder %s21, 0
    %p153 = por %p151, %p152
    %s155 = sadd.s32 %s154, 1
    %p158 = scmp.eq.s32.totalorder %s15, 1
    %p159 = scmp.ne.s32.totalorder %s154, %s156
    %p160 = scmp.eq.s32.totalorder %s15, 0
    %p161 = por %p159, %p160
    %p162 = scmp.ne.s32.totalorder %s154, %s156
    %p163 = scmp.eq.s32.totalorder %s20, 1
    %p164 = por %p162, %p163
    %p165 = scmp.ne.s32.totalorder %s156, %s157
    %p166 = scmp.eq.s32.totalorder %s20, 0
    %p167 = por %p165, %p166
    %p168 = scmp.ne.s32.totalorder %s156, %s157
    %p169 = scmp.eq.s32.totalorder %s21, 1
    %p170 = por %p168, %p169
    %p172 = scmp.ne.s32.totalorder %s157, %s171
    %p173 = scmp.eq.s32.totalorder %s21, 0
    %p174 = por %p172, %p173
    %s176 = sadd.s32 %s175, 1
    %p179 = scmp.eq.s32.totalorder %s15, 1
    %p180 = scmp.ne.s32.totalorder %s175, %s177
    %p181 = scmp.eq.s32.totalorder %s15, 0
    %p182 = por %p180, %p181
    %p183 = scmp.ne.s32.totalorder %s175, %s177
    %p184 = scmp.eq.s32.totalorder %s20, 1
    %p185 = por %p183, %p184
    %p186 = scmp.ne.s32.totalorder %s177, %s178
    %p187 = scmp.eq.s32.totalorder %s20, 0
    %p188 = por %p186, %p187
    %p189 = scmp.ne.s32.totalorder %s177, %s178
    %p190 = scmp.eq.s32.totalorder %s21, 1
    %p191 = por %p189, %p190
    %p193 = scmp.ne.s32.totalorder %s178, %s192
    %p194 = scmp.eq.s32.totalorder %s21, 0
    %p195 = por %p193, %p194
    %s197 = sadd.s32 %s196, 1
    %p200 = scmp.eq.s32.totalorder %s15, 1
    %p201 = scmp.ne.s32.totalorder %s196, %s198
    %p202 = scmp.eq.s32.totalorder %s15, 0
    %p203 = por %p201, %p202
    %p204 = scmp.ne.s32.totalorder %s196, %s198
    %p205 = scmp.eq.s32.totalorder %s20, 1
    %p206 = por %p204, %p205
    %p207 = scmp.ne.s32.totalorder %s198, %s199
    %p208 = scmp.eq.s32.totalorder %s20, 0
    %p209 = por %p207, %p208
    %p210 = scmp.ne.s32.totalorder %s198, %s199
    %p211 = scmp.eq.s32.totalorder %s21, 1
    %p212 = por %p210, %p211
    %p214 = scmp.ne.s32.totalorder %s199, %s213
    %p215 = scmp.eq.s32.totalorder %s21, 0
    %p216 = por %p214, %p215
    %s217 = ssub.s32 %s15, %s22
    %p218 = scmp.eq.s32.totalorder %s217, 0
    %s220 = sadd.s32 %s219, 1
    %s221 = scalar_select %p218, %s219, %s220
    %p224 = pneg %p218
    %p225 = scmp.eq.s32.totalorder %s15, 1
    %p226 = por %p224, %p225
    %p227 = scmp.ne.s32.totalorder %s219, %s222
    %p228 = scmp.eq.s32.totalorder %s15, 0
    %p229 = por %p227, %p228
    %p230 = scmp.ne.s32.totalorder %s219, %s222
    %p231 = scmp.eq.s32.totalorder %s20, 1
    %p232 = por %p230, %p231
    %p233 = scmp.ne.s32.totalorder %s222, %s223
    %p234 = scmp.eq.s32.totalorder %s20, 0
    %p235 = por %p233, %p234
    %p236 = scmp.ne.s32.totalorder %s222, %s223
    %p237 = scmp.eq.s32.totalorder %s21, 1
    %p238 = por %p236, %p237
    %p240 = scmp.ne.s32.totalorder %s223, %s239
    %p241 = scmp.eq.s32.totalorder %s21, 0
    %p242 = por %p240, %p241
    %p243 = scmp.le.s32.totalorder 1, %s15
    %p244 = scmp.lt.s32.totalorder %s15, 3
    %p245 = pnand %p243, %p244
    %p246 = pneg %p245
    // Predicated region
    $region9: #{tpu_custom_call.1} parent=5 // pred_check
      _
    $region10: #{tpu_custom_call.1} parent=5 // pred_check_branch
      %248 = sbr.rel (%p245) target = $region12
    $region11: #{tpu_custom_call.1} parent=5 // pred_region
      %s249 = ssub.s32 %s15, 1
      // Predicated region
      $region13: #{tpu_custom_call.1} parent=11 // pred_check
        %p250 = pneg %p62
      $region14: #{tpu_custom_call.1} parent=11 // pred_check_branch
        %252 = sbr.rel (%p250) target = $region16
      $region15: #{tpu_custom_call.1} parent=11 // pred_region
        _
      $region16: #{tpu_custom_call.1} parent=11 // pred_fallthru
        _
      // Predicated region
      $region17: #{tpu_custom_call.1} parent=11 // pred_check
        %p253 = pneg %p83
      $region18: #{tpu_custom_call.1} parent=11 // pred_check_branch
        %255 = sbr.rel (%p253) target = $region20
      $region19: #{tpu_custom_call.1} parent=11 // pred_region
        _
      $region20: #{tpu_custom_call.1} parent=11 // pred_fallthru
        _
      // Predicated region
      $region21: #{tpu_custom_call.1} parent=11 // pred_check
        %p256 = pneg %p104
      $region22: #{tpu_custom_call.1} parent=11 // pred_check_branch
        %258 = sbr.rel (%p256) target = $region24
      $region23: #{tpu_custom_call.1} parent=11 // pred_region
        _
      $region24: #{tpu_custom_call.1} parent=11 // pred_fallthru
        _
      // Predicated region
      $region25: #{tpu_custom_call.1} parent=11 // pred_check
        %p259 = pneg %p125
      $region26: #{tpu_custom_call.1} parent=11 // pred_check_branch
        %261 = sbr.rel (%p259) target = $region28
      $region27: #{tpu_custom_call.1} parent=11 // pred_region
        _
      $region28: #{tpu_custom_call.1} parent=11 // pred_fallthru
        _
      // Predicated region
      $region29: #{tpu_custom_call.1} parent=11 // pred_check
        %p262 = pneg %p146
      $region30: #{tpu_custom_call.1} parent=11 // pred_check_branch
        %264 = sbr.rel (%p262) target = $region32
      $region31: #{tpu_custom_call.1} parent=11 // pred_region
        _
      $region32: #{tpu_custom_call.1} parent=11 // pred_fallthru
        _
      // Predicated region
      $region33: #{tpu_custom_call.1} parent=11 // pred_check
        %p265 = pneg %p167
      $region34: #{tpu_custom_call.1} parent=11 // pred_check_branch
        %267 = sbr.rel (%p265) target = $region36
      $region35: #{tpu_custom_call.1} parent=11 // pred_region
        _
      $region36: #{tpu_custom_call.1} parent=11 // pred_fallthru
        _
      // Predicated region
      $region37: #{tpu_custom_call.1} parent=11 // pred_check
        %p268 = pneg %p188
      $region38: #{tpu_custom_call.1} parent=11 // pred_check_branch
        %270 = sbr.rel (%p268) target = $region40
      $region39: #{tpu_custom_call.1} parent=11 // pred_region
        _
      $region40: #{tpu_custom_call.1} parent=11 // pred_fallthru
        _
      // Predicated region
      $region41: #{tpu_custom_call.1} parent=11 // pred_check
        %p271 = pneg %p209
      $region42: #{tpu_custom_call.1} parent=11 // pred_check_branch
        %273 = sbr.rel (%p271) target = $region44
      $region43: #{tpu_custom_call.1} parent=11 // pred_region
        _
      $region44: #{tpu_custom_call.1} parent=11 // pred_fallthru
        _
    $region12: #{tpu_custom_call.1} parent=5 // pred_fallthru
      _
    %p274 = scmp.lt.s32.totalorder %s15, 2
    // Predicated region
    $region45: #{tpu_custom_call.1} parent=5 // pred_check
      %p275 = pneg %p274
    $region46: #{tpu_custom_call.1} parent=5 // pred_check_branch
      %277 = sbr.rel (%p275) target = $region48
    $region47: #{tpu_custom_call.1} parent=5 // pred_region
      // Predicated region
      $region49: #{tpu_custom_call.1} parent=47 // pred_check
        %p278 = pneg %p35
      $region50: #{tpu_custom_call.1} parent=47 // pred_check_branch
        %280 = sbr.rel (%p278) target = $region52
      $region51: #{tpu_custom_call.1} parent=47 // pred_region
        %s281 = smul.u32 64, %s15
        %p282 = scmp.lt.s32.totalorder %s281, 127
        %s283 = scalar_select %p282, %s281, 127
        %s284 = smul.addr %s283, 8
        %s285 = scalar_lea.vmem %s0, %s284
        %s286 = smul.u32 64, %s15
      $region52: #{tpu_custom_call.1} parent=47 // pred_fallthru
        _
    $region48: #{tpu_custom_call.1} parent=5 // pred_fallthru
      _
    %p287 = scmp.le.s32.totalorder 1, %s15
    %p288 = scmp.lt.s32.totalorder %s15, 3
    %p289 = pnand %p287, %p288
    %p290 = pneg %p289
    // Predicated region
    $region53: #{tpu_custom_call.1} parent=5 // pred_check
      _
    $region54: #{tpu_custom_call.1} parent=5 // pred_check_branch
      %292 = sbr.rel (%p289) target = $region56
    $region55: #{tpu_custom_call.1} parent=5 // pred_region
      %s293 = ssub.s32 %s15, 1
      %s294 = smul.u32 64, %s20
      %p295 = scmp.lt.s32.totalorder %s294, 127
      %s296 = scalar_select %p295, %s294, 127
      %s297 = smul.addr %s296, 8
      %s298 = scalar_lea.vmem %s0, %s297
      %p299 = pneg %p41
      %p300 = pneg %p38
      %p301 = pneg %p62
      %p302 = pneg %p59
      %p303 = pneg %p83
      %p304 = pneg %p80
      %p305 = pneg %p104
      %p306 = pneg %p101
      %p307 = pneg %p125
      %p308 = pneg %p122
      %p309 = pneg %p146
      %p310 = pneg %p143
      %p311 = pneg %p167
      %p312 = pneg %p164
      %p313 = pneg %p188
      %p314 = pneg %p185
      %p315 = pneg %p209
      %p316 = pneg %p206
      %p317 = pneg %p235
      %p318 = pneg %p232
      %s319 = smul.u32 64, %s20
      %p320 = scmp.lt.s32.totalorder %s319, 127
      %s321 = scalar_select %p320, %s319, 127
      %s322 = smul.addr %s321, 8
      %s323 = scalar_lea.vmem %s9, %s322
      %s324 = smul.u32 64, %s20
      %p325 = scmp.lt.s32.totalorder %s324, 127
      %s326 = scalar_select %p325, %s324, 127
      %s327 = smul.addr %s326, 8
      %s328 = scalar_lea.vmem %s0, %s327
      %s329 = smul.u32 64, %s20
      %s330 = smul.u32 64, %s20
      %p331 = scmp.lt.s32.totalorder %s330, 127
      %s332 = scalar_select %p331, %s330, 127
      %s333 = smul.addr %s332, 8
      %s334 = scalar_lea.vmem %s9, %s333
      %s335 = smul.u32 64, %s20
      %v337 = vld [vmem:[%s328] sm:$0xff]
      %v338 = vld [vmem:[%s328 + $0x8] sm:$0xff]
      %v339 = vld [vmem:[%s328 + $0x10] sm:$0xff]
      %v340 = vld [vmem:[%s328 + $0x18] sm:$0xff]
      %v341 = vld [vmem:[%s328 + $0x20] sm:$0xff]
      %v342 = vld [vmem:[%s328 + $0x28] sm:$0xff]
      %v343 = vld [vmem:[%s328 + $0x30] sm:$0xff]
      %v344 = vld [vmem:[%s328 + $0x38] sm:$0xff]
      %v345 = vld [vmem:[%s328 + $0x40] sm:$0xff]
      %v346 = vld [vmem:[%s328 + $0x48] sm:$0xff]
      %v347 = vld [vmem:[%s328 + $0x50] sm:$0xff]
      %v348 = vld [vmem:[%s328 + $0x58] sm:$0xff]
      %v349 = vld [vmem:[%s328 + $0x60] sm:$0xff]
      %v350 = vld [vmem:[%s328 + $0x68] sm:$0xff]
      %v351 = vld [vmem:[%s328 + $0x70] sm:$0xff]
      %v352 = vld [vmem:[%s328 + $0x78] sm:$0xff]
      %v353 = vld [vmem:[%s328 + $0x80] sm:$0xff]
      %v354 = vld [vmem:[%s328 + $0x88] sm:$0xff]
      %v355 = vld [vmem:[%s328 + $0x90] sm:$0xff]
      %v356 = vld [vmem:[%s328 + $0x98] sm:$0xff]
      %v357 = vld [vmem:[%s328 + $0xa0] sm:$0xff]
      %v358 = vld [vmem:[%s328 + $0xa8] sm:$0xff]
      %v359 = vld [vmem:[%s328 + $0xb0] sm:$0xff]
      %v360 = vld [vmem:[%s328 + $0xb8] sm:$0xff]
      %v361 = vld [vmem:[%s328 + $0xc0] sm:$0xff]
      %v362 = vld [vmem:[%s328 + $0xc8] sm:$0xff]
      %v363 = vld [vmem:[%s328 + $0xd0] sm:$0xff]
      %v364 = vld [vmem:[%s328 + $0xd8] sm:$0xff]
      %v365 = vld [vmem:[%s328 + $0xe0] sm:$0xff]
      %v366 = vld [vmem:[%s328 + $0xe8] sm:$0xff]
      %v367 = vld [vmem:[%s328 + $0xf0] sm:$0xff]
      %v368 = vld [vmem:[%s328 + $0xf8] sm:$0xff]
      %v369 = vld [vmem:[%s328 + $0x100] sm:$0xff]
      %v370 = vld [vmem:[%s328 + $0x108] sm:$0xff]
      %v371 = vld [vmem:[%s328 + $0x110] sm:$0xff]
      %v372 = vld [vmem:[%s328 + $0x118] sm:$0xff]
      %v373 = vld [vmem:[%s328 + $0x120] sm:$0xff]
      %v374 = vld [vmem:[%s328 + $0x128] sm:$0xff]
      %v375 = vld [vmem:[%s328 + $0x130] sm:$0xff]
      %v376 = vld [vmem:[%s328 + $0x138] sm:$0xff]
      %v377 = vld [vmem:[%s328 + $0x140] sm:$0xff]
      %v378 = vld [vmem:[%s328 + $0x148] sm:$0xff]
      %v379 = vld [vmem:[%s328 + $0x150] sm:$0xff]
      %v380 = vld [vmem:[%s328 + $0x158] sm:$0xff]
      %v381 = vld [vmem:[%s328 + $0x160] sm:$0xff]
      %v382 = vld [vmem:[%s328 + $0x168] sm:$0xff]
      %v383 = vld [vmem:[%s328 + $0x170] sm:$0xff]
      %v384 = vld [vmem:[%s328 + $0x178] sm:$0xff]
      %v385 = vld [vmem:[%s328 + $0x180] sm:$0xff]
      %v386 = vld [vmem:[%s328 + $0x188] sm:$0xff]
      %v387 = vld [vmem:[%s328 + $0x190] sm:$0xff]
      %v388 = vld [vmem:[%s328 + $0x198] sm:$0xff]
      %v389 = vld [vmem:[%s328 + $0x1a0] sm:$0xff]
      %v390 = vld [vmem:[%s328 + $0x1a8] sm:$0xff]
      %v391 = vld [vmem:[%s328 + $0x1b0] sm:$0xff]
      %v392 = vld [vmem:[%s328 + $0x1b8] sm:$0xff]
      %v393 = vld [vmem:[%s328 + $0x1c0] sm:$0xff]
      %v394 = vld [vmem:[%s328 + $0x1c8] sm:$0xff]
      %v395 = vld [vmem:[%s328 + $0x1d0] sm:$0xff]
      %v396 = vld [vmem:[%s328 + $0x1d8] sm:$0xff]
      %v397 = vld [vmem:[%s328 + $0x1e0] sm:$0xff]
      %v398 = vld [vmem:[%s328 + $0x1e8] sm:$0xff]
      %v399 = vld [vmem:[%s328 + $0x1f0] sm:$0xff]
      %v400 = vld [vmem:[%s328 + $0x1f8] sm:$0xff]
      %401 = vxpose.xlu0.b32.start [1/16] %v337, 128
      %402 = vxpose.xlu0.b32.cont [2/16] %v338, 128
      %403 = vxpose.xlu0.b32.cont [3/16] %v339, 128
      %404 = vxpose.xlu0.b32.cont [4/16] %v340, 128
      %405 = vxpose.xlu0.b32.cont [5/16] %v341, 128
      %406 = vxpose.xlu0.b32.cont [6/16] %v342, 128
      %407 = vxpose.xlu0.b32.cont [7/16] %v343, 128
      %408 = vxpose.xlu0.b32.cont [8/16] %v344, 128
      %409 = vxpose.xlu0.b32.cont [9/16] %v345, 128
      %410 = vxpose.xlu0.b32.cont [10/16] %v346, 128
      %411 = vxpose.xlu0.b32.cont [11/16] %v347, 128
      %412 = vxpose.xlu0.b32.cont [12/16] %v348, 128
      %413 = vxpose.xlu0.b32.cont [13/16] %v349, 128
      %414 = vxpose.xlu0.b32.cont [14/16] %v350, 128
      %415 = vxpose.xlu0.b32.cont [15/16] %v351, 128
      %416 = vxpose.xlu0.b32.end [16/16] %v352, 128
      %v417 = vpop.trf.xlu0
      %v418 = vpop.trf.xlu0
      %v419 = vpop.trf.xlu0
      %v420 = vpop.trf.xlu0
      %v421 = vpop.trf.xlu0
      %v422 = vpop.trf.xlu0
      %v423 = vpop.trf.xlu0
      %v424 = vpop.trf.xlu0
      %v425 = vpop.trf.xlu0
      %v426 = vpop.trf.xlu0
      %v427 = vpop.trf.xlu0
      %v428 = vpop.trf.xlu0
      %v429 = vpop.trf.xlu0
      %v430 = vpop.trf.xlu0
      %v431 = vpop.trf.xlu0
      %v432 = vpop.trf.xlu0
      %433 = vxpose.xlu0.b32.start [1/16] %v353, 128
      %434 = vxpose.xlu0.b32.cont [2/16] %v354, 128
      %435 = vxpose.xlu0.b32.cont [3/16] %v355, 128
      %436 = vxpose.xlu0.b32.cont [4/16] %v356, 128
      %437 = vxpose.xlu0.b32.cont [5/16] %v357, 128
      %438 = vxpose.xlu0.b32.cont [6/16] %v358, 128
      %439 = vxpose.xlu0.b32.cont [7/16] %v359, 128
      %440 = vxpose.xlu0.b32.cont [8/16] %v360, 128
      %441 = vxpose.xlu0.b32.cont [9/16] %v361, 128
      %442 = vxpose.xlu0.b32.cont [10/16] %v362, 128
      %443 = vxpose.xlu0.b32.cont [11/16] %v363, 128
      %444 = vxpose.xlu0.b32.cont [12/16] %v364, 128
      %445 = vxpose.xlu0.b32.cont [13/16] %v365, 128
      %446 = vxpose.xlu0.b32.cont [14/16] %v366, 128
      %447 = vxpose.xlu0.b32.cont [15/16] %v367, 128
      %448 = vxpose.xlu0.b32.end [16/16] %v368, 128
      %v449 = vpop.trf.xlu0
      %v450 = vpop.trf.xlu0
      %v451 = vpop.trf.xlu0
      %v452 = vpop.trf.xlu0
      %v453 = vpop.trf.xlu0
      %v454 = vpop.trf.xlu0
      %v455 = vpop.trf.xlu0
      %v456 = vpop.trf.xlu0
      %v457 = vpop.trf.xlu0
      %v458 = vpop.trf.xlu0
      %v459 = vpop.trf.xlu0
      %v460 = vpop.trf.xlu0
      %v461 = vpop.trf.xlu0
      %v462 = vpop.trf.xlu0
      %v463 = vpop.trf.xlu0
      %v464 = vpop.trf.xlu0
      %465 = vxpose.xlu0.b32.start [1/16] %v369, 128
      %466 = vxpose.xlu0.b32.cont [2/16] %v370, 128
      %467 = vxpose.xlu0.b32.cont [3/16] %v371, 128
      %468 = vxpose.xlu0.b32.cont [4/16] %v372, 128
      %469 = vxpose.xlu0.b32.cont [5/16] %v373, 128
      %470 = vxpose.xlu0.b32.cont [6/16] %v374, 128
      %471 = vxpose.xlu0.b32.cont [7/16] %v375, 128
      %472 = vxpose.xlu0.b32.cont [8/16] %v376, 128
      %473 = vxpose.xlu0.b32.cont [9/16] %v377, 128
      %474 = vxpose.xlu0.b32.cont [10/16] %v378, 128
      %475 = vxpose.xlu0.b32.cont [11/16] %v379, 128
      %476 = vxpose.xlu0.b32.cont [12/16] %v380, 128
      %477 = vxpose.xlu0.b32.cont [13/16] %v381, 128
      %478 = vxpose.xlu0.b32.cont [14/16] %v382, 128
      %479 = vxpose.xlu0.b32.cont [15/16] %v383, 128
      %480 = vxpose.xlu0.b32.end [16/16] %v384, 128
      %v481 = vpop.trf.xlu0
      %v482 = vpop.trf.xlu0
      %v483 = vpop.trf.xlu0
      %v484 = vpop.trf.xlu0
      %v485 = vpop.trf.xlu0
      %v486 = vpop.trf.xlu0
      %v487 = vpop.trf.xlu0
      %v488 = vpop.trf.xlu0
      %v489 = vpop.trf.xlu0
      %v490 = vpop.trf.xlu0
      %v491 = vpop.trf.xlu0
      %v492 = vpop.trf.xlu0
      %v493 = vpop.trf.xlu0
      %v494 = vpop.trf.xlu0
      %v495 = vpop.trf.xlu0
      %v496 = vpop.trf.xlu0
      %497 = vxpose.xlu0.b32.start [1/16] %v385, 128
      %498 = vxpose.xlu0.b32.cont [2/16] %v386, 128
      %499 = vxpose.xlu0.b32.cont [3/16] %v387, 128
      %500 = vxpose.xlu0.b32.cont [4/16] %v388, 128
      %501 = vxpose.xlu0.b32.cont [5/16] %v389, 128
      %502 = vxpose.xlu0.b32.cont [6/16] %v390, 128
      %503 = vxpose.xlu0.b32.cont [7/16] %v391, 128
      %504 = vxpose.xlu0.b32.cont [8/16] %v392, 128
      %505 = vxpose.xlu0.b32.cont [9/16] %v393, 128
      %506 = vxpose.xlu0.b32.cont [10/16] %v394, 128
      %507 = vxpose.xlu0.b32.cont [11/16] %v395, 128
      %508 = vxpose.xlu0.b32.cont [12/16] %v396, 128
      %509 = vxpose.xlu0.b32.cont [13/16] %v397, 128
      %510 = vxpose.xlu0.b32.cont [14/16] %v398, 128
      %511 = vxpose.xlu0.b32.cont [15/16] %v399, 128
      %512 = vxpose.xlu0.b32.end [16/16] %v400, 128
      %v513 = vpop.trf.xlu0
      %v514 = vpop.trf.xlu0
      %v515 = vpop.trf.xlu0
      %v516 = vpop.trf.xlu0
      %v517 = vpop.trf.xlu0
      %v518 = vpop.trf.xlu0
      %v519 = vpop.trf.xlu0
      %v520 = vpop.trf.xlu0
      %v521 = vpop.trf.xlu0
      %v522 = vpop.trf.xlu0
      %v523 = vpop.trf.xlu0
      %v524 = vpop.trf.xlu0
      %v525 = vpop.trf.xlu0
      %v526 = vpop.trf.xlu0
      %v527 = vpop.trf.xlu0
      %v528 = vpop.trf.xlu0
      %v529 = vld [vmem:[%s1] sm:$0xf]
      %v530 = vld [vmem:[%s1 + $0x4] sm:$0xf]
      %v531 = vpack.c.bf16 %v418, %v417
      %v532 = vpack.c.bf16 %v450, %v449
      %v533 = vpack.c.bf16 %v482, %v481
      %v534 = vpack.c.bf16 %v514, %v513
      %v535 = vpack.c.bf16 %v420, %v419
      %v536 = vpack.c.bf16 %v452, %v451
      %v537 = vpack.c.bf16 %v484, %v483
      %v538 = vpack.c.bf16 %v516, %v515
      %v539 = vld [vmem:[%s2] sm:$0xff]
      %v540 = vld [vmem:[%s2 + $0x8] sm:$0xff]
      %542 = vset.pattern.permute.xlu0 0
      %543 = vperm.xlu0 %542, %v539
      %v544 = vpop.permute.xlu0 %543
      %547 = vset.pattern.permute.xlu0 0
      %548 = vperm.xlu0 %547, %v540
      %v549 = vpop.permute.xlu0 %548
      %v553 = vunpack.c.l.b16 %v529
      %v554 = vunpack.c.l.b16 %v530
      %v555 = vpack.c.b16 %v554, %v553
      %vm556 = vcmask 261120
      %v558 = vsel %vm556, %v555, 0
      %560 = vmatprep.subr.bf16.mxu0 %v532
      %561 = vmatpush1.bf16.msra.mxu0 %v531
      %562 = vmatprep.subr.bf16.mxu0 %v536
      %563 = vmatpush1.bf16.msra.mxu0 %v535
      %564 = vmatprep.subr.bf16.mxu0 0
      %565 = vmatpush1.bf16.msra.mxu0 0
      %566 = vmatprep.subr.bf16.mxu0 0
      %567 = vmatpush1.bf16.msra.mxu0 0
      %568 = vmatprep.subr.bf16.mxu0 0
      %569 = vmatpush1.bf16.msra.mxu0 0
      %570 = vmatprep.subr.bf16.mxu0 0
      %571 = vmatpush1.bf16.msra.mxu0 0
      %572 = vmatprep.subr.bf16.mxu0 0
      %573 = vmatpush1.bf16.msra.mxu0 0
      %574 = vmatprep.subr.bf16.mxu0 0
      %575 = vmatpush1.bf16.msra.mxu0 0
      %576 = vmatprep.subr.bf16.mxu0 0
      %577 = vmatpush1.bf16.msra.mxu0 0
      %578 = vmatprep.subr.bf16.mxu0 0
      %579 = vmatpush1.bf16.msra.mxu0 0
      %580 = vmatprep.subr.bf16.mxu0 0
      %581 = vmatpush1.bf16.msra.mxu0 0
      %582 = vmatprep.subr.bf16.mxu0 0
      %583 = vmatpush1.bf16.msra.mxu0 0
      %584 = vmatprep.subr.bf16.mxu0 0
      %585 = vmatpush1.bf16.msra.mxu0 0
      %586 = vmatprep.subr.bf16.mxu0 0
      %587 = vmatpush1.bf16.msra.mxu0 0
      %588 = vmatprep.subr.bf16.mxu0 0
      %589 = vmatpush1.bf16.msra.mxu0 0
      %590 = vmatprep.subr.bf16.mxu0 0
      %591 = vmatpush1.bf16.msra.mxu0 0
      %592 = vmatprep.mubr.bf16.mxu0 0
      %593 = vmatmul.mubr.bf16.gmra.mrb[0].mxu0 %v558
      %v594 = vpop.f32.mrb[0].mxu0
      %v595 = vadd.f32 %v544, %v594
      %v596 = vpop.f32.mrb[0].mxu0
      %v597 = vadd.f32 %v544, %v596
      %v598 = vpop.f32.mrb[0].mxu0
      %v599 = vadd.f32 %v549, %v598
      %v600 = vpop.f32.mrb[0].mxu0
      %v601 = vadd.f32 %v549, %v600
      %602 = vdwg.mxu0
      %603 = vmatprep.subr.bf16.mxu0 %v534
      %604 = vmatpush1.bf16.msra.mxu0 %v533
      %605 = vmatprep.subr.bf16.mxu0 %v538
      %606 = vmatpush1.bf16.msra.mxu0 %v537
      %607 = vmatprep.subr.bf16.mxu0 0
      %608 = vmatpush1.bf16.msra.mxu0 0
      %609 = vmatprep.subr.bf16.mxu0 0
      %610 = vmatpush1.bf16.msra.mxu0 0
      %611 = vmatprep.subr.bf16.mxu0 0
      %612 = vmatpush1.bf16.msra.mxu0 0
      %613 = vmatprep.subr.bf16.mxu0 0
      %614 = vmatpush1.bf16.msra.mxu0 0
      %615 = vmatprep.subr.bf16.mxu0 0
      %616 = vmatpush1.bf16.msra.mxu0 0
      %617 = vmatprep.subr.bf16.mxu0 0
      %618 = vmatpush1.bf16.msra.mxu0 0
      %619 = vmatprep.subr.bf16.mxu0 0
      %620 = vmatpush1.bf16.msra.mxu0 0
      %621 = vmatprep.subr.bf16.mxu0 0
      %622 = vmatpush1.bf16.msra.mxu0 0
      %623 = vmatprep.subr.bf16.mxu0 0
      %624 = vmatpush1.bf16.msra.mxu0 0
      %625 = vmatprep.subr.bf16.mxu0 0
      %626 = vmatpush1.bf16.msra.mxu0 0
      %627 = vmatprep.subr.bf16.mxu0 0
      %628 = vmatpush1.bf16.msra.mxu0 0
      %629 = vmatprep.subr.bf16.mxu0 0
      %630 = vmatpush1.bf16.msra.mxu0 0
      %631 = vmatprep.subr.bf16.mxu0 0
      %632 = vmatpush1.bf16.msra.mxu0 0
      %633 = vmatprep.subr.bf16.mxu0 0
      %634 = vmatpush1.bf16.msra.mxu0 0
      %635 = vmatprep.mubr.bf16.mxu0 0
      %636 = vmatmul.mubr.bf16.gmra.mrb[0].mxu0 %v558
      %v637 = vpop.f32.mrb[0].mxu0
      %v638 = vadd.f32 %v544, %v637
      %v639 = vpop.f32.mrb[0].mxu0
      %v640 = vadd.f32 %v544, %v639
      %v641 = vpop.f32.mrb[0].mxu0
      %v642 = vadd.f32 %v549, %v641
      %v643 = vpop.f32.mrb[0].mxu0
      %v644 = vadd.f32 %v549, %v643
      %645 = vdwg.mxu0
      %v646 = vmul.f32 %v595, 0.5
      %v647 = vmul.f32 %v597, 0.5
      %v648 = vmul.f32 %v638, 0.5
      %v649 = vmul.f32 %v640, 0.5
      %v650 = vmul.f32 %v599, 0.5
      %v651 = vmul.f32 %v601, 0.5
      %v652 = vmul.f32 %v642, 0.5
      %v653 = vmul.f32 %v644, 0.5
      %v654 = vtanh.pop %v646
      %v655 = vtanh.pop %v647
      %v656 = vtanh.pop %v648
      %v657 = vtanh.pop %v649
      %v658 = vtanh.pop %v650
      %v659 = vtanh.pop %v651
      %v660 = vtanh.pop %v652
      %v661 = vtanh.pop %v653
      %v662 = vmul.f32 %v654, 0.5
      %v663 = vmul.f32 %v655, 0.5
      %v664 = vmul.f32 %v656, 0.5
      %v665 = vmul.f32 %v657, 0.5
      %v666 = vmul.f32 %v658, 0.5
      %v667 = vmul.f32 %v659, 0.5
      %v668 = vmul.f32 %v660, 0.5
      %v669 = vmul.f32 %v661, 0.5
      %v670 = vadd.f32 %v662, 0.5
      %v671 = vadd.f32 %v663, 0.5
      %v672 = vadd.f32 %v664, 0.5
      %v673 = vadd.f32 %v665, 0.5
      %v674 = vadd.f32 %v666, 0.5
      %v675 = vadd.f32 %v667, 0.5
      %v676 = vadd.f32 %v668, 0.5
      %v677 = vadd.f32 %v669, 0.5
      %v678 = vld [vmem:[%s3] sm:$0xf]
      %v679 = vpack.c.bf16 %v674, %v670
      %v680 = vpack.c.bf16 %v675, %v671
      %v681 = vpack.c.bf16 %v676, %v672
      %v682 = vpack.c.bf16 %v677, %v673
      %v683 = vld [vmem:[%s4] sm:$0xff]
      %685 = vset.pattern.permute.xlu0 0
      %686 = vperm.xlu0 %685, %v683
      %v687 = vpop.permute.xlu0 %686
      %vm689 = vcmask 130048
      %v691 = vsel %vm689, %v678, 0
      %693 = vmatprep.subr.bf16.mxu0 %v680
      %694 = vmatpush1.bf16.msra.mxu0 %v679
      %695 = vmatprep.subr.bf16.mxu0 0
      %696 = vmatpush1.bf16.msra.mxu0 0
      %697 = vmatprep.subr.bf16.mxu0 0
      %698 = vmatpush1.bf16.msra.mxu0 0
      %699 = vmatprep.subr.bf16.mxu0 0
      %700 = vmatpush1.bf16.msra.mxu0 0
      %701 = vmatprep.subr.bf16.mxu0 0
      %702 = vmatpush1.bf16.msra.mxu0 0
      %703 = vmatprep.subr.bf16.mxu0 0
      %704 = vmatpush1.bf16.msra.mxu0 0
      %705 = vmatprep.subr.bf16.mxu0 0
      %706 = vmatpush1.bf16.msra.mxu0 0
      %707 = vmatprep.subr.bf16.mxu0 0
      %708 = vmatpush1.bf16.msra.mxu0 0
      %709 = vmatprep.subr.bf16.mxu0 0
      %710 = vmatpush1.bf16.msra.mxu0 0
      %711 = vmatprep.subr.bf16.mxu0 0
      %712 = vmatpush1.bf16.msra.mxu0 0
      %713 = vmatprep.subr.bf16.mxu0 0
      %714 = vmatpush1.bf16.msra.mxu0 0
      %715 = vmatprep.subr.bf16.mxu0 0
      %716 = vmatpush1.bf16.msra.mxu0 0
      %717 = vmatprep.subr.bf16.mxu0 0
      %718 = vmatpush1.bf16.msra.mxu0 0
      %719 = vmatprep.subr.bf16.mxu0 0
      %720 = vmatpush1.bf16.msra.mxu0 0
      %721 = vmatprep.subr.bf16.mxu0 0
      %722 = vmatpush1.bf16.msra.mxu0 0
      %723 = vmatprep.subr.bf16.mxu0 0
      %724 = vmatpush1.bf16.msra.mxu0 0
      %725 = vmatprep.mubr.bf16.mxu0 0
      %726 = vmatmul.mubr.bf16.gmra.mrb[0].mxu0 %v691
      %v727 = vpop.f32.mrb[0].mxu0
      %v728 = vadd.f32 %v687, %v727
      %v729 = vpop.f32.mrb[0].mxu0
      %v730 = vadd.f32 %v687, %v729
      %v731 = vpop.f32.mrb[0].mxu0
      %v732 = vpop.f32.mrb[0].mxu0
      %733 = vdwg.mxu0
      %734 = vmatprep.subr.bf16.mxu0 %v682
      %735 = vmatpush1.bf16.msra.mxu0 %v681
      %736 = vmatprep.subr.bf16.mxu0 0
      %737 = vmatpush1.bf16.msra.mxu0 0
      %738 = vmatprep.subr.bf16.mxu0 0
      %739 = vmatpush1.bf16.msra.mxu0 0
      %740 = vmatprep.subr.bf16.mxu0 0
      %741 = vmatpush1.bf16.msra.mxu0 0
      %742 = vmatprep.subr.bf16.mxu0 0
      %743 = vmatpush1.bf16.msra.mxu0 0
      %744 = vmatprep.subr.bf16.mxu0 0
      %745 = vmatpush1.bf16.msra.mxu0 0
      %746 = vmatprep.subr.bf16.mxu0 0
      %747 = vmatpush1.bf16.msra.mxu0 0
      %748 = vmatprep.subr.bf16.mxu0 0
      %749 = vmatpush1.bf16.msra.mxu0 0
      %750 = vmatprep.subr.bf16.mxu0 0
      %751 = vmatpush1.bf16.msra.mxu0 0
      %752 = vmatprep.subr.bf16.mxu0 0
      %753 = vmatpush1.bf16.msra.mxu0 0
      %754 = vmatprep.subr.bf16.mxu0 0
      %755 = vmatpush1.bf16.msra.mxu0 0
      %756 = vmatprep.subr.bf16.mxu0 0
      %757 = vmatpush1.bf16.msra.mxu0 0
      %758 = vmatprep.subr.bf16.mxu0 0
      %759 = vmatpush1.bf16.msra.mxu0 0
      %760 = vmatprep.subr.bf16.mxu0 0
      %761 = vmatpush1.bf16.msra.mxu0 0
      %762 = vmatprep.subr.bf16.mxu0 0
      %763 = vmatpush1.bf16.msra.mxu0 0
      %764 = vmatprep.subr.bf16.mxu0 0
      %765 = vmatpush1.bf16.msra.mxu0 0
      %766 = vmatprep.mubr.bf16.mxu0 0
      %767 = vmatmul.mubr.bf16.gmra.mrb[0].mxu0 %v691
      %v768 = vpop.f32.mrb[0].mxu0
      %v769 = vadd.f32 %v687, %v768
      %v770 = vpop.f32.mrb[0].mxu0
      %v771 = vadd.f32 %v687, %v770
      %v772 = vpop.f32.mrb[0].mxu0
      %v773 = vpop.f32.mrb[0].mxu0
      %774 = vdwg.mxu0
      %v775 = vmax.f32 %v728, 0.0
      %v776 = vmax.f32 %v730, 0.0
      %v777 = vmax.f32 %v769, 0.0
      %v778 = vmax.f32 %v771, 0.0
      %v779 = vld [vmem:[%s5] sm:$0xf]
      %v780 = vld [vmem:[%s5 + $0x4] sm:$0xf]
      %v781 = vpack.c.bf16 %v775, %v775
      %v782 = vpack.c.bf16 %v776, %v776
      %v783 = vpack.c.bf16 %v777, %v777
      %v784 = vpack.c.bf16 %v778, %v778
      %v785 = vld [vmem:[%s6] sm:$0xff]
      %v786 = vld [vmem:[%s6 + $0x8] sm:$0xff]
      %788 = vset.pattern.permute.xlu0 0
      %789 = vperm.xlu0 %788, %v785
      %v790 = vpop.permute.xlu0 %789
      %793 = vset.pattern.permute.xlu0 0
      %794 = vperm.xlu0 %793, %v786
      %v795 = vpop.permute.xlu0 %794
      %v799 = vunpack.c.l.b16 %v779
      %v800 = vunpack.c.l.b16 %v780
      %v801 = vpack.c.b16 %v800, %v799
      %vm802 = vcmask 64512
      %v804 = vsel %vm802, %v801, 0
      %vm806 = vcmask 1043456
      %v808 = vsel %vm806, %v781, 0
      %v811 = vsel %vm806, %v782, 0
      %v814 = vsel %vm806, %v783, 0
      %v817 = vsel %vm806, %v784, 0
      %819 = vmatprep.subr.bf16.mxu0 %v811
      %820 = vmatpush1.bf16.msra.mxu0 %v808
      %821 = vmatprep.subr.bf16.mxu0 0
      %822 = vmatpush1.bf16.msra.mxu0 0
      %823 = vmatprep.subr.bf16.mxu0 0
      %824 = vmatpush1.bf16.msra.mxu0 0
      %825 = vmatprep.subr.bf16.mxu0 0
      %826 = vmatpush1.bf16.msra.mxu0 0
      %827 = vmatprep.subr.bf16.mxu0 0
      %828 = vmatpush1.bf16.msra.mxu0 0
      %829 = vmatprep.subr.bf16.mxu0 0
      %830 = vmatpush1.bf16.msra.mxu0 0
      %831 = vmatprep.subr.bf16.mxu0 0
      %832 = vmatpush1.bf16.msra.mxu0 0
      %833 = vmatprep.subr.bf16.mxu0 0
      %834 = vmatpush1.bf16.msra.mxu0 0
      %835 = vmatprep.subr.bf16.mxu0 0
      %836 = vmatpush1.bf16.msra.mxu0 0
      %837 = vmatprep.subr.bf16.mxu0 0
      %838 = vmatpush1.bf16.msra.mxu0 0
      %839 = vmatprep.subr.bf16.mxu0 0
      %840 = vmatpush1.bf16.msra.mxu0 0
      %841 = vmatprep.subr.bf16.mxu0 0
      %842 = vmatpush1.bf16.msra.mxu0 0
      %843 = vmatprep.subr.bf16.mxu0 0
      %844 = vmatpush1.bf16.msra.mxu0 0
      %845 = vmatprep.subr.bf16.mxu0 0
      %846 = vmatpush1.bf16.msra.mxu0 0
      %847 = vmatprep.subr.bf16.mxu0 0
      %848 = vmatpush1.bf16.msra.mxu0 0
      %849 = vmatprep.subr.bf16.mxu0 0
      %850 = vmatpush1.bf16.msra.mxu0 0
      %851 = vmatprep.mubr.bf16.mxu0 0
      %852 = vmatmul.mubr.bf16.gmra.mrb[0].mxu0 %v804
      %v853 = vpop.f32.mrb[0].mxu0
      %v854 = vadd.f32 %v790, %v853
      %v855 = vpop.f32.mrb[0].mxu0
      %v856 = vadd.f32 %v790, %v855
      %v857 = vpop.f32.mrb[0].mxu0
      %v858 = vadd.f32 %v795, %v857
      %v859 = vpop.f32.mrb[0].mxu0
      %v860 = vadd.f32 %v795, %v859
      %861 = vdwg.mxu0
      %862 = vmatprep.subr.bf16.mxu0 %v817
      %863 = vmatpush1.bf16.msra.mxu0 %v814
      %864 = vmatprep.subr.bf16.mxu0 0
      %865 = vmatpush1.bf16.msra.mxu0 0
      %866 = vmatprep.subr.bf16.mxu0 0
      %867 = vmatpush1.bf16.msra.mxu0 0
      %868 = vmatprep.subr.bf16.mxu0 0
      %869 = vmatpush1.bf16.msra.mxu0 0
      %870 = vmatprep.subr.bf16.mxu0 0
      %871 = vmatpush1.bf16.msra.mxu0 0
      %872 = vmatprep.subr.bf16.mxu0 0
      %873 = vmatpush1.bf16.msra.mxu0 0
      %874 = vmatprep.subr.bf16.mxu0 0
      %875 = vmatpush1.bf16.msra.mxu0 0
      %876 = vmatprep.subr.bf16.mxu0 0
      %877 = vmatpush1.bf16.msra.mxu0 0
      %878 = vmatprep.subr.bf16.mxu0 0
      %879 = vmatpush1.bf16.msra.mxu0 0
      %880 = vmatprep.subr.bf16.mxu0 0
      %881 = vmatpush1.bf16.msra.mxu0 0
      %882 = vmatprep.subr.bf16.mxu0 0
      %883 = vmatpush1.bf16.msra.mxu0 0
      %884 = vmatprep.subr.bf16.mxu0 0
      %885 = vmatpush1.bf16.msra.mxu0 0
      %886 = vmatprep.subr.bf16.mxu0 0
      %887 = vmatpush1.bf16.msra.mxu0 0
      %888 = vmatprep.subr.bf16.mxu0 0
      %889 = vmatpush1.bf16.msra.mxu0 0
      %890 = vmatprep.subr.bf16.mxu0 0
      %891 = vmatpush1.bf16.msra.mxu0 0
      %892 = vmatprep.subr.bf16.mxu0 0
      %893 = vmatpush1.bf16.msra.mxu0 0
      %894 = vmatprep.mubr.bf16.mxu0 0
      %895 = vmatmul.mubr.bf16.gmra.mrb[0].mxu0 %v804
      %v896 = vpop.f32.mrb[0].mxu0
      %v897 = vadd.f32 %v790, %v896
      %v898 = vpop.f32.mrb[0].mxu0
      %v899 = vadd.f32 %v790, %v898
      %v900 = vpop.f32.mrb[0].mxu0
      %v901 = vadd.f32 %v795, %v900
      %v902 = vpop.f32.mrb[0].mxu0
      %v903 = vadd.f32 %v795, %v902
      %904 = vdwg.mxu0
      %v905 = vmax.f32 %v854, 0.0
      %v906 = vmax.f32 %v856, 0.0
      %v907 = vmax.f32 %v897, 0.0
      %v908 = vmax.f32 %v899, 0.0
      %v909 = vmax.f32 %v858, 0.0
      %v910 = vmax.f32 %v860, 0.0
      %v911 = vmax.f32 %v901, 0.0
      %v912 = vmax.f32 %v903, 0.0
      %v913 = vld [vmem:[%s7] sm:$0xf]
      %v914 = vld [vmem:[%s7 + $0x4] sm:$0xf]
      %v915 = vld [vmem:[%s7 + $0x8] sm:$0xf]
      %v916 = vld [vmem:[%s7 + $0xc] sm:$0xf]
      %v917 = vpack.c.bf16 %v909, %v905
      %v918 = vpack.c.bf16 %v910, %v906
      %v919 = vpack.c.bf16 %v911, %v907
      %v920 = vpack.c.bf16 %v912, %v908
      %v921 = vld [vmem:[%s8] sm:$0xff]
      %v922 = vld [vmem:[%s8 + $0x8] sm:$0xff]
      %v923 = vld [vmem:[%s8 + $0x10] sm:$0xff]
      %v924 = vld [vmem:[%s8 + $0x18] sm:$0xff]
      %926 = vset.pattern.permute.xlu0 0
      %927 = vperm.xlu0 %926, %v921
      %v928 = vpop.permute.xlu0 %927
      %931 = vset.pattern.permute.xlu0 0
      %932 = vperm.xlu0 %931, %v922
      %v933 = vpop.permute.xlu0 %932
      %936 = vset.pattern.permute.xlu0 0
      %937 = vperm.xlu0 %936, %v923
      %v938 = vpop.permute.xlu0 %937
      %941 = vset.pattern.permute.xlu0 0
      %942 = vperm.xlu0 %941, %v924
      %v943 = vpop.permute.xlu0 %942
      %v949 = vunpack.c.l.b16 %v913
      %v950 = vunpack.c.l.b16 %v914
      %v951 = vunpack.c.l.b16 %v915
      %v952 = vunpack.c.l.b16 %v916
      %v953 = vpack.c.b16 %v950, %v949
      %v954 = vpack.c.b16 %v952, %v951
      %v956 = vsel %vm689, %v953, 0
      %v959 = vsel %vm689, %v954, 0
      %961 = vmatprep.subr.bf16.mxu0 %v918
      %962 = vmatpush1.bf16.msra.mxu0 %v917
      %963 = vmatprep.subr.bf16.mxu0 0
      %964 = vmatpush1.bf16.msra.mxu0 0
      %965 = vmatprep.subr.bf16.mxu0 0
      %966 = vmatpush1.bf16.msra.mxu0 0
      %967 = vmatprep.subr.bf16.mxu0 0
      %968 = vmatpush1.bf16.msra.mxu0 0
      %969 = vmatprep.subr.bf16.mxu0 0
      %970 = vmatpush1.bf16.msra.mxu0 0
      %971 = vmatprep.subr.bf16.mxu0 0
      %972 = vmatpush1.bf16.msra.mxu0 0
      %973 = vmatprep.subr.bf16.mxu0 0
      %974 = vmatpush1.bf16.msra.mxu0 0
      %975 = vmatprep.subr.bf16.mxu0 0
      %976 = vmatpush1.bf16.msra.mxu0 0
      %977 = vmatprep.subr.bf16.mxu0 0
      %978 = vmatpush1.bf16.msra.mxu0 0
      %979 = vmatprep.subr.bf16.mxu0 0
      %980 = vmatpush1.bf16.msra.mxu0 0
      %981 = vmatprep.subr.bf16.mxu0 0
      %982 = vmatpush1.bf16.msra.mxu0 0
      %983 = vmatprep.subr.bf16.mxu0 0
      %984 = vmatpush1.bf16.msra.mxu0 0
      %985 = vmatprep.subr.bf16.mxu0 0
      %986 = vmatpush1.bf16.msra.mxu0 0
      %987 = vmatprep.subr.bf16.mxu0 0
      %988 = vmatpush1.bf16.msra.mxu0 0
      %989 = vmatprep.subr.bf16.mxu0 0
      %990 = vmatpush1.bf16.msra.mxu0 0
      %991 = vmatprep.subr.bf16.mxu0 0
      %992 = vmatpush1.bf16.msra.mxu0 0
      %993 = vmatprep.mubr.bf16.mxu0 0
      %994 = vmatmul.mubr.bf16.gmra.mrb[0].mxu0 %v956
      %v995 = vpop.f32.mrb[0].mxu0
      %v996 = vadd.f32 %v928, %v995
      %v997 = vpop.f32.mrb[0].mxu0
      %v998 = vadd.f32 %v928, %v997
      %v999 = vpop.f32.mrb[0].mxu0
      %v1000 = vadd.f32 %v933, %v999
      %v1001 = vpop.f32.mrb[0].mxu0
      %v1002 = vadd.f32 %v933, %v1001
      %1003 = vmatprep.mubr.bf16.mxu0 0
      %1004 = vmatmul.mubr.bf16.gmra.mrb[0].mxu0 %v959
      %v1005 = vpop.f32.mrb[0].mxu0
      %v1006 = vadd.f32 %v938, %v1005
      %v1007 = vpop.f32.mrb[0].mxu0
      %v1008 = vadd.f32 %v938, %v1007
      %v1009 = vpop.f32.mrb[0].mxu0
      %v1010 = vadd.f32 %v943, %v1009
      %v1011 = vpop.f32.mrb[0].mxu0
      %v1012 = vadd.f32 %v943, %v1011
      %1013 = vdwg.mxu0
      %1014 = vmatprep.subr.bf16.mxu0 %v920
      %1015 = vmatpush1.bf16.msra.mxu0 %v919
      %1016 = vmatprep.subr.bf16.mxu0 0
      %1017 = vmatpush1.bf16.msra.mxu0 0
      %1018 = vmatprep.subr.bf16.mxu0 0
      %1019 = vmatpush1.bf16.msra.mxu0 0
      %1020 = vmatprep.subr.bf16.mxu0 0
      %1021 = vmatpush1.bf16.msra.mxu0 0
      %1022 = vmatprep.subr.bf16.mxu0 0
      %1023 = vmatpush1.bf16.msra.mxu0 0
      %1024 = vmatprep.subr.bf16.mxu0 0
      %1025 = vmatpush1.bf16.msra.mxu0 0
      %1026 = vmatprep.subr.bf16.mxu0 0
      %1027 = vmatpush1.bf16.msra.mxu0 0
      %1028 = vmatprep.subr.bf16.mxu0 0
      %1029 = vmatpush1.bf16.msra.mxu0 0
      %1030 = vmatprep.subr.bf16.mxu0 0
      %1031 = vmatpush1.bf16.msra.mxu0 0
      %1032 = vmatprep.subr.bf16.mxu0 0
      %1033 = vmatpush1.bf16.msra.mxu0 0
      %1034 = vmatprep.subr.bf16.mxu0 0
      %1035 = vmatpush1.bf16.msra.mxu0 0
      %1036 = vmatprep.subr.bf16.mxu0 0
      %1037 = vmatpush1.bf16.msra.mxu0 0
      %1038 = vmatprep.subr.bf16.mxu0 0
      %1039 = vmatpush1.bf16.msra.mxu0 0
      %1040 = vmatprep.subr.bf16.mxu0 0
      %1041 = vmatpush1.bf16.msra.mxu0 0
      %1042 = vmatprep.subr.bf16.mxu0 0
      %1043 = vmatpush1.bf16.msra.mxu0 0
      %1044 = vmatprep.subr.bf16.mxu0 0
      %1045 = vmatpush1.bf16.msra.mxu0 0
      %1046 = vmatprep.mubr.bf16.mxu0 0
      %1047 = vmatmul.mubr.bf16.gmra.mrb[0].mxu0 %v956
      %v1048 = vpop.f32.mrb[0].mxu0
      %v1049 = vadd.f32 %v928, %v1048
      %v1050 = vpop.f32.mrb[0].mxu0
      %v1051 = vadd.f32 %v928, %v1050
      %v1052 = vpop.f32.mrb[0].mxu0
      %v1053 = vadd.f32 %v933, %v1052
      %v1054 = vpop.f32.mrb[0].mxu0
      %v1055 = vadd.f32 %v933, %v1054
      %1056 = vmatprep.mubr.bf16.mxu0 0
      %1057 = vmatmul.mubr.bf16.gmra.mrb[0].mxu0 %v959
      %v1058 = vpop.f32.mrb[0].mxu0
      %v1059 = vadd.f32 %v938, %v1058
      %v1060 = vpop.f32.mrb[0].mxu0
      %v1061 = vadd.f32 %v938, %v1060
      %v1062 = vpop.f32.mrb[0].mxu0
      %v1063 = vadd.f32 %v943, %v1062
      %v1064 = vpop.f32.mrb[0].mxu0
      %v1065 = vadd.f32 %v943, %v1064
      %1066 = vdwg.mxu0
      %v1067 = vmul.f32 %v996, 0.5
      %v1068 = vmul.f32 %v998, 0.5
      %v1069 = vmul.f32 %v1049, 0.5
      %v1070 = vmul.f32 %v1051, 0.5
      %v1071 = vmul.f32 %v1000, 0.5
      %v1072 = vmul.f32 %v1002, 0.5
      %v1073 = vmul.f32 %v1053, 0.5
      %v1074 = vmul.f32 %v1055, 0.5
      %v1075 = vmul.f32 %v1006, 0.5
      %v1076 = vmul.f32 %v1008, 0.5
      %v1077 = vmul.f32 %v1059, 0.5
      %v1078 = vmul.f32 %v1061, 0.5
      %v1079 = vmul.f32 %v1010, 0.5
      %v1080 = vmul.f32 %v1012, 0.5
      %v1081 = vmul.f32 %v1063, 0.5
      %v1082 = vmul.f32 %v1065, 0.5
      %v1083 = vtanh.pop %v1067
      %v1084 = vtanh.pop %v1068
      %v1085 = vtanh.pop %v1069
      %v1086 = vtanh.pop %v1070
      %v1087 = vtanh.pop %v1071
      %v1088 = vtanh.pop %v1072
      %v1089 = vtanh.pop %v1073
      %v1090 = vtanh.pop %v1074
      %v1091 = vtanh.pop %v1075
      %v1092 = vtanh.pop %v1076
      %v1093 = vtanh.pop %v1077
      %v1094 = vtanh.pop %v1078
      %v1095 = vtanh.pop %v1079
      %v1096 = vtanh.pop %v1080
      %v1097 = vtanh.pop %v1081
      %v1098 = vtanh.pop %v1082
      %v1099 = vmul.f32 %v1083, 0.5
      %v1100 = vmul.f32 %v1084, 0.5
      %v1101 = vmul.f32 %v1085, 0.5
      %v1102 = vmul.f32 %v1086, 0.5
      %v1103 = vmul.f32 %v1087, 0.5
      %v1104 = vmul.f32 %v1088, 0.5
      %v1105 = vmul.f32 %v1089, 0.5
      %v1106 = vmul.f32 %v1090, 0.5
      %v1107 = vmul.f32 %v1091, 0.5
      %v1108 = vmul.f32 %v1092, 0.5
      %v1109 = vmul.f32 %v1093, 0.5
      %v1110 = vmul.f32 %v1094, 0.5
      %v1111 = vmul.f32 %v1095, 0.5
      %v1112 = vmul.f32 %v1096, 0.5
      %v1113 = vmul.f32 %v1097, 0.5
      %v1114 = vmul.f32 %v1098, 0.5
      %v1115 = vadd.f32 %v1099, 0.5
      %v1116 = vadd.f32 %v1100, 0.5
      %v1117 = vadd.f32 %v1101, 0.5
      %v1118 = vadd.f32 %v1102, 0.5
      %v1119 = vadd.f32 %v1103, 0.5
      %v1120 = vadd.f32 %v1104, 0.5
      %v1121 = vadd.f32 %v1105, 0.5
      %v1122 = vadd.f32 %v1106, 0.5
      %v1123 = vadd.f32 %v1107, 0.5
      %v1124 = vadd.f32 %v1108, 0.5
      %v1125 = vadd.f32 %v1109, 0.5
      %v1126 = vadd.f32 %v1110, 0.5
      %v1127 = vadd.f32 %v1111, 0.5
      %v1128 = vadd.f32 %v1112, 0.5
      %v1129 = vadd.f32 %v1113, 0.5
      %v1130 = vadd.f32 %v1114, 0.5
      %1131 = vxpose.xlu0.b32.start [1/16] %v1115, 128
      %1132 = vxpose.xlu0.b32.cont [2/16] %v1119, 128
      %1133 = vxpose.xlu0.b32.cont [3/16] %v1123, 128
      %1134 = vxpose.xlu0.b32.cont [4/16] %v1127, 128
      %1135 = vxpose.xlu0.b32.cont [5/16] 0.0, 128
      %1136 = vxpose.xlu0.b32.cont [6/16] 0.0, 128
      %1137 = vxpose.xlu0.b32.cont [7/16] 0.0, 128
      %1138 = vxpose.xlu0.b32.cont [8/16] 0.0, 128
      %1139 = vxpose.xlu0.b32.cont [9/16] 0.0, 128
      %1140 = vxpose.xlu0.b32.cont [10/16] 0.0, 128
      %1141 = vxpose.xlu0.b32.cont [11/16] 0.0, 128
      %1142 = vxpose.xlu0.b32.cont [12/16] 0.0, 128
      %1143 = vxpose.xlu0.b32.cont [13/16] 0.0, 128
      %1144 = vxpose.xlu0.b32.cont [14/16] 0.0, 128
      %1145 = vxpose.xlu0.b32.cont [15/16] 0.0, 128
      %1146 = vxpose.xlu0.b32.end [16/16] 0.0, 128
      %v1147 = vpop.trf.xlu0
      %v1148 = vpop.trf.xlu0
      %v1149 = vpop.trf.xlu0
      %v1150 = vpop.trf.xlu0
      %v1151 = vpop.trf.xlu0
      %v1152 = vpop.trf.xlu0
      %v1153 = vpop.trf.xlu0
      %v1154 = vpop.trf.xlu0
      %v1155 = vpop.trf.xlu0
      %v1156 = vpop.trf.xlu0
      %v1157 = vpop.trf.xlu0
      %v1158 = vpop.trf.xlu0
      %v1159 = vpop.trf.xlu0
      %v1160 = vpop.trf.xlu0
      %v1161 = vpop.trf.xlu0
      %v1162 = vpop.trf.xlu0
      %1163 = vxpose.xlu0.b32.start [1/16] %v1116, 128
      %1164 = vxpose.xlu0.b32.cont [2/16] %v1120, 128
      %1165 = vxpose.xlu0.b32.cont [3/16] %v1124, 128
      %1166 = vxpose.xlu0.b32.cont [4/16] %v1128, 128
      %1167 = vxpose.xlu0.b32.cont [5/16] 0.0, 128
      %1168 = vxpose.xlu0.b32.cont [6/16] 0.0, 128
      %1169 = vxpose.xlu0.b32.cont [7/16] 0.0, 128
      %1170 = vxpose.xlu0.b32.cont [8/16] 0.0, 128
      %1171 = vxpose.xlu0.b32.cont [9/16] 0.0, 128
      %1172 = vxpose.xlu0.b32.cont [10/16] 0.0, 128
      %1173 = vxpose.xlu0.b32.cont [11/16] 0.0, 128
      %1174 = vxpose.xlu0.b32.cont [12/16] 0.0, 128
      %1175 = vxpose.xlu0.b32.cont [13/16] 0.0, 128
      %1176 = vxpose.xlu0.b32.cont [14/16] 0.0, 128
      %1177 = vxpose.xlu0.b32.cont [15/16] 0.0, 128
      %1178 = vxpose.xlu0.b32.end [16/16] 0.0, 128
      %v1179 = vpop.trf.xlu0
      %v1180 = vpop.trf.xlu0
      %v1181 = vpop.trf.xlu0
      %v1182 = vpop.trf.xlu0
      %v1183 = vpop.trf.xlu0
      %v1184 = vpop.trf.xlu0
      %v1185 = vpop.trf.xlu0
      %v1186 = vpop.trf.xlu0
      %v1187 = vpop.trf.xlu0
      %v1188 = vpop.trf.xlu0
      %v1189 = vpop.trf.xlu0
      %v1190 = vpop.trf.xlu0
      %v1191 = vpop.trf.xlu0
      %v1192 = vpop.trf.xlu0
      %v1193 = vpop.trf.xlu0
      %v1194 = vpop.trf.xlu0
      %1195 = vxpose.xlu0.b32.start [1/16] %v1117, 128
      %1196 = vxpose.xlu0.b32.cont [2/16] %v1121, 128
      %1197 = vxpose.xlu0.b32.cont [3/16] %v1125, 128
      %1198 = vxpose.xlu0.b32.cont [4/16] %v1129, 128
      %1199 = vxpose.xlu0.b32.cont [5/16] 0.0, 128
      %1200 = vxpose.xlu0.b32.cont [6/16] 0.0, 128
      %1201 = vxpose.xlu0.b32.cont [7/16] 0.0, 128
      %1202 = vxpose.xlu0.b32.cont [8/16] 0.0, 128
      %1203 = vxpose.xlu0.b32.cont [9/16] 0.0, 128
      %1204 = vxpose.xlu0.b32.cont [10/16] 0.0, 128
      %1205 = vxpose.xlu0.b32.cont [11/16] 0.0, 128
      %1206 = vxpose.xlu0.b32.cont [12/16] 0.0, 128
      %1207 = vxpose.xlu0.b32.cont [13/16] 0.0, 128
      %1208 = vxpose.xlu0.b32.cont [14/16] 0.0, 128
      %1209 = vxpose.xlu0.b32.cont [15/16] 0.0, 128
      %1210 = vxpose.xlu0.b32.end [16/16] 0.0, 128
      %v1211 = vpop.trf.xlu0
      %v1212 = vpop.trf.xlu0
      %v1213 = vpop.trf.xlu0
      %v1214 = vpop.trf.xlu0
      %v1215 = vpop.trf.xlu0
      %v1216 = vpop.trf.xlu0
      %v1217 = vpop.trf.xlu0
      %v1218 = vpop.trf.xlu0
      %v1219 = vpop.trf.xlu0
      %v1220 = vpop.trf.xlu0
      %v1221 = vpop.trf.xlu0
      %v1222 = vpop.trf.xlu0
      %v1223 = vpop.trf.xlu0
      %v1224 = vpop.trf.xlu0
      %v1225 = vpop.trf.xlu0
      %v1226 = vpop.trf.xlu0
      %1227 = vxpose.xlu0.b32.start [1/16] %v1118, 128
      %1228 = vxpose.xlu0.b32.cont [2/16] %v1122, 128
      %1229 = vxpose.xlu0.b32.cont [3/16] %v1126, 128
      %1230 = vxpose.xlu0.b32.cont [4/16] %v1130, 128
      %1231 = vxpose.xlu0.b32.cont [5/16] 0.0, 128
      %1232 = vxpose.xlu0.b32.cont [6/16] 0.0, 128
      %1233 = vxpose.xlu0.b32.cont [7/16] 0.0, 128
      %1234 = vxpose.xlu0.b32.cont [8/16] 0.0, 128
      %1235 = vxpose.xlu0.b32.cont [9/16] 0.0, 128
      %1236 = vxpose.xlu0.b32.cont [10/16] 0.0, 128
      %1237 = vxpose.xlu0.b32.cont [11/16] 0.0, 128
      %1238 = vxpose.xlu0.b32.cont [12/16] 0.0, 128
      %1239 = vxpose.xlu0.b32.cont [13/16] 0.0, 128
      %1240 = vxpose.xlu0.b32.cont [14/16] 0.0, 128
      %1241 = vxpose.xlu0.b32.cont [15/16] 0.0, 128
      %1242 = vxpose.xlu0.b32.end [16/16] 0.0, 128
      %v1243 = vpop.trf.xlu0
      %v1244 = vpop.trf.xlu0
      %v1245 = vpop.trf.xlu0
      %v1246 = vpop.trf.xlu0
      %v1247 = vpop.trf.xlu0
      %v1248 = vpop.trf.xlu0
      %v1249 = vpop.trf.xlu0
      %v1250 = vpop.trf.xlu0
      %v1251 = vpop.trf.xlu0
      %v1252 = vpop.trf.xlu0
      %v1253 = vpop.trf.xlu0
      %v1254 = vpop.trf.xlu0
      %v1255 = vpop.trf.xlu0
      %v1256 = vpop.trf.xlu0
      %v1257 = vpop.trf.xlu0
      %v1258 = vpop.trf.xlu0
      %1259 = vst.msk [vmem:[%s334] sm:$0xff] %vm556, %v1147
      %1260 = vst.msk [vmem:[%s334 + $0x8] sm:$0xff] %vm556, %v1148
      %1261 = vst.msk [vmem:[%s334 + $0x10] sm:$0xff] %vm556, %v1149
      %1262 = vst.msk [vmem:[%s334 + $0x18] sm:$0xff] %vm556, %v1150
      %1263 = vst.msk [vmem:[%s334 + $0x20] sm:$0xff] %vm556, %v1151
      %1264 = vst.msk [vmem:[%s334 + $0x28] sm:$0xff] %vm556, %v1152
      %1265 = vst.msk [vmem:[%s334 + $0x30] sm:$0xff] %vm556, %v1153
      %1266 = vst.msk [vmem:[%s334 + $0x38] sm:$0xff] %vm556, %v1154
      %1267 = vst.msk [vmem:[%s334 + $0x40] sm:$0xff] %vm556, %v1155
      %1268 = vst.msk [vmem:[%s334 + $0x48] sm:$0xff] %vm556, %v1156
      %1269 = vst.msk [vmem:[%s334 + $0x50] sm:$0xff] %vm556, %v1157
      %1270 = vst.msk [vmem:[%s334 + $0x58] sm:$0xff] %vm556, %v1158
      %1271 = vst.msk [vmem:[%s334 + $0x60] sm:$0xff] %vm556, %v1159
      %1272 = vst.msk [vmem:[%s334 + $0x68] sm:$0xff] %vm556, %v1160
      %1273 = vst.msk [vmem:[%s334 + $0x70] sm:$0xff] %vm556, %v1161
      %1274 = vst.msk [vmem:[%s334 + $0x78] sm:$0xff] %vm556, %v1162
      %1275 = vst.msk [vmem:[%s334 + $0x80] sm:$0xff] %vm556, %v1179
      %1276 = vst.msk [vmem:[%s334 + $0x88] sm:$0xff] %vm556, %v1180
      %1277 = vst.msk [vmem:[%s334 + $0x90] sm:$0xff] %vm556, %v1181
      %1278 = vst.msk [vmem:[%s334 + $0x98] sm:$0xff] %vm556, %v1182
      %1279 = vst.msk [vmem:[%s334 + $0xa0] sm:$0xff] %vm556, %v1183
      %1280 = vst.msk [vmem:[%s334 + $0xa8] sm:$0xff] %vm556, %v1184
      %1281 = vst.msk [vmem:[%s334 + $0xb0] sm:$0xff] %vm556, %v1185
      %1282 = vst.msk [vmem:[%s334 + $0xb8] sm:$0xff] %vm556, %v1186
      %1283 = vst.msk [vmem:[%s334 + $0xc0] sm:$0xff] %vm556, %v1187
      %1284 = vst.msk [vmem:[%s334 + $0xc8] sm:$0xff] %vm556, %v1188
      %1285 = vst.msk [vmem:[%s334 + $0xd0] sm:$0xff] %vm556, %v1189
      %1286 = vst.msk [vmem:[%s334 + $0xd8] sm:$0xff] %vm556, %v1190
      %1287 = vst.msk [vmem:[%s334 + $0xe0] sm:$0xff] %vm556, %v1191
      %1288 = vst.msk [vmem:[%s334 + $0xe8] sm:$0xff] %vm556, %v1192
      %1289 = vst.msk [vmem:[%s334 + $0xf0] sm:$0xff] %vm556, %v1193
      %1290 = vst.msk [vmem:[%s334 + $0xf8] sm:$0xff] %vm556, %v1194
      %1291 = vst.msk [vmem:[%s334 + $0x100] sm:$0xff] %vm556, %v1211
      %1292 = vst.msk [vmem:[%s334 + $0x108] sm:$0xff] %vm556, %v1212
      %1293 = vst.msk [vmem:[%s334 + $0x110] sm:$0xff] %vm556, %v1213
      %1294 = vst.msk [vmem:[%s334 + $0x118] sm:$0xff] %vm556, %v1214
      %1295 = vst.msk [vmem:[%s334 + $0x120] sm:$0xff] %vm556, %v1215
      %1296 = vst.msk [vmem:[%s334 + $0x128] sm:$0xff] %vm556, %v1216
      %1297 = vst.msk [vmem:[%s334 + $0x130] sm:$0xff] %vm556, %v1217
      %1298 = vst.msk [vmem:[%s334 + $0x138] sm:$0xff] %vm556, %v1218
      %1299 = vst.msk [vmem:[%s334 + $0x140] sm:$0xff] %vm556, %v1219
      %1300 = vst.msk [vmem:[%s334 + $0x148] sm:$0xff] %vm556, %v1220
      %1301 = vst.msk [vmem:[%s334 + $0x150] sm:$0xff] %vm556, %v1221
      %1302 = vst.msk [vmem:[%s334 + $0x158] sm:$0xff] %vm556, %v1222
      %1303 = vst.msk [vmem:[%s334 + $0x160] sm:$0xff] %vm556, %v1223
      %1304 = vst.msk [vmem:[%s334 + $0x168] sm:$0xff] %vm556, %v1224
      %1305 = vst.msk [vmem:[%s334 + $0x170] sm:$0xff] %vm556, %v1225
      %1306 = vst.msk [vmem:[%s334 + $0x178] sm:$0xff] %vm556, %v1226
      %1307 = vst.msk [vmem:[%s334 + $0x180] sm:$0xff] %vm556, %v1243
      %1308 = vst.msk [vmem:[%s334 + $0x188] sm:$0xff] %vm556, %v1244
      %1309 = vst.msk [vmem:[%s334 + $0x190] sm:$0xff] %vm556, %v1245
      %1310 = vst.msk [vmem:[%s334 + $0x198] sm:$0xff] %vm556, %v1246
      %1311 = vst.msk [vmem:[%s334 + $0x1a0] sm:$0xff] %vm556, %v1247
      %1312 = vst.msk [vmem:[%s334 + $0x1a8] sm:$0xff] %vm556, %v1248
      %1313 = vst.msk [vmem:[%s334 + $0x1b0] sm:$0xff] %vm556, %v1249
      %1314 = vst.msk [vmem:[%s334 + $0x1b8] sm:$0xff] %vm556, %v1250
      %1315 = vst.msk [vmem:[%s334 + $0x1c0] sm:$0xff] %vm556, %v1251
      %1316 = vst.msk [vmem:[%s334 + $0x1c8] sm:$0xff] %vm556, %v1252
      %1317 = vst.msk [vmem:[%s334 + $0x1d0] sm:$0xff] %vm556, %v1253
      %1318 = vst.msk [vmem:[%s334 + $0x1d8] sm:$0xff] %vm556, %v1254
      %1319 = vst.msk [vmem:[%s334 + $0x1e0] sm:$0xff] %vm556, %v1255
      %1320 = vst.msk [vmem:[%s334 + $0x1e8] sm:$0xff] %vm556, %v1256
      %1321 = vst.msk [vmem:[%s334 + $0x1f0] sm:$0xff] %vm556, %v1257
      %1322 = vst.msk [vmem:[%s334 + $0x1f8] sm:$0xff] %vm556, %v1258
      %s1323 = smul.u32 64, %s20
      %p1324 = scmp.lt.s32.totalorder %s1323, 127
      %s1325 = scalar_select %p1324, %s1323, 127
      %s1326 = smul.addr %s1325, 8
      %s1327 = scalar_lea.vmem %s9, %s1326
      // Predicated region
      $region57: #{tpu_custom_call.1} parent=55 // pred_check
        %p1328 = pneg %p232
      $region58: #{tpu_custom_call.1} parent=55 // pred_check_branch
        %1330 = sbr.rel (%p1328) target = $region60
      $region59: #{tpu_custom_call.1} parent=55 // pred_region
        %s1331 = smul.u32 64, %s20
      $region60: #{tpu_custom_call.1} parent=55 // pred_fallthru
        _
    $region56: #{tpu_custom_call.1} parent=5 // pred_fallthru
      _
    %p1332 = scmp.le.s32.totalorder 2, %s15
    // Predicated region
    $region61: #{tpu_custom_call.1} parent=5 // pred_check
      %p1333 = pneg %p1332
    $region62: #{tpu_custom_call.1} parent=5 // pred_check_branch
      %1335 = sbr.rel (%p1333) target = $region64
    $region63: #{tpu_custom_call.1} parent=5 // pred_region
      %s1336 = ssub.s32 %s15, 2
      // Predicated region
      $region65: #{tpu_custom_call.1} parent=63 // pred_check
        %p1337 = pneg %p238
      $region66: #{tpu_custom_call.1} parent=63 // pred_check_branch
        %1339 = sbr.rel (%p1337) target = $region68
      $region67: #{tpu_custom_call.1} parent=63 // pred_region
        %s1340 = smul.u32 64, %s21
        %p1341 = scmp.lt.s32.totalorder %s1340, 127
        %s1342 = scalar_select %p1341, %s1340, 127
        %s1343 = smul.addr %s1342, 8
        %s1344 = scalar_lea.vmem %s9, %s1343
      $region68: #{tpu_custom_call.1} parent=63 // pred_fallthru
        _
    $region64: #{tpu_custom_call.1} parent=5 // pred_fallthru
      _
  $region6: #{tpu_custom_call.1} parent=0 // loop_footer
    %s19 = sadd.s32 1, %s15
  $region7: #{tpu_custom_call.1} parent=0 // loop_footer_branch
    %14 = sbr.rel target = $region3
  $region8: #{tpu_custom_call.1} parent=0 // loop_exit
    _

</llo_original>
